<compile_context>
chip_gen: v6e
topology: v6e:2x2x1
jax: 0.10.0
libtpu: 0.0.40
codegen_flags: <defaults>
</compile_context>

<pallas_src>
import functools

import jax
import jax.numpy as jnp
from jax.experimental import pallas as pl
from jax.experimental.pallas import tpu as pltpu

NEG_SLOPE = 0.2                    # LeakyReLU negative slope (module default)
NEG_BIG = -1e30                    # "minus infinity" init for the running shift
_TN = (((0,), (0,)), ((), ()))     # lhs-transposed contraction for dot_general
_VMEM_LIMIT = 32 * 1024 * 1024     # scoped-VMEM budget (safe on v5e / v6e / v7x)
_HI = jax.lax.Precision.HIGHEST


# ------------------ fused GAT-with-edge-feat forward kernel ------------------ #
def _gat_fused_kernel(mp_op,
                      cs_ref, nc_ref,                    # scalar prefetch (SMEM)
                      src_ref, ef_ref, dst_ref,          # per-edge-chunk streams
                      dstf_ref, wa_ref, wb_ref, wdst_ref, bias_ref,
                      out_ref,                           # output tile
                      nh_sc, mrun_sc, l_sc, acc_sc):     # scratch (persist over k)
    t = pl.program_id(0)                                 # dst tile
    k = pl.program_id(1)                                 # edge chunk within tile
    tile_d, ho = nh_sc.shape
    tile_e = dst_ref.shape[0]

    @pl.when(k == 0)
    def _init():
        # fc_dst once per destination tile; stays resident for all edge chunks.
        nh_sc[...] = jnp.dot(dstf_ref[...], wdst_ref[...],
                             preferred_element_type=jnp.float32)
        mrun_sc[...] = jnp.full(mrun_sc.shape, NEG_BIG, jnp.float32)
        l_sc[...] = jnp.zeros_like(l_sc)
        acc_sc[...] = jnp.zeros_like(acc_sc)

    @pl.when(k < nc_ref[t])
    def _accumulate():
        src = src_ref[...].astype(jnp.float32)
        ef = ef_ref[...].astype(jnp.float32)
        # fc_src(combine(src, edge)) on the MXU, fused with the aggregation so
        # the [E, H*O] message stream never touches HBM.
        if mp_op == "concat":
            m = (jnp.dot(src, wa_ref[...], preferred_element_type=jnp.float32)
                 + jnp.dot(ef, wb_ref[...], preferred_element_type=jnp.float32))
        else:
            if mp_op == "add":
                z = src + ef
            elif mp_op == "sub":
                z = src - ef
            elif mp_op == "mul":
                z = src * ef
            else:  # "div"
                z = src / ef
            m = jnp.dot(z, wa_ref[...], preferred_element_type=jnp.float32)

        dst = dst_ref[...]                                            # [Te, 1]
        cols = jax.lax.broadcasted_iota(jnp.int32, (tile_e, tile_d), 1) + t * tile_d
        onehot = (dst == cols).astype(jnp.float32)                    # [Te, Td]

        # n_h[dst[e]] for in-tile edges via one-hot matmul; 0 for edges whose
        # dst lies outside this tile (they only influence the shift, which is
        # safe: any per-tile upper bound keeps exp() <= 1 and cancels exactly).
        nh_e = jnp.dot(onehot, nh_sc[...], preferred_element_type=jnp.float32)
        pre = m + nh_e                                                # e_add_v
        s = jnp.where(pre > 0, pre, NEG_SLOPE * pre)                  # LeakyReLU

        # online softmax with a per-(dst-tile, channel) running shift
        m_new = jnp.maximum(mrun_sc[...], jnp.max(s, axis=0, keepdims=True))
        scale = jnp.exp(mrun_sc[...] - m_new)                         # [1, HO]
        p = jnp.exp(s - m_new)                                        # [Te, HO]
        # segment sums over this chunk's edges -> MXU (one-hot^T @ .)
        l_sc[...] = l_sc[...] * scale + jax.lax.dot_general(
            onehot, p, _TN, preferred_element_type=jnp.float32)
        acc_sc[...] = acc_sc[...] * scale + jax.lax.dot_general(
            onehot, p * m, _TN, preferred_element_type=jnp.float32)
        mrun_sc[...] = m_new

    @pl.when(k == pl.num_programs(1) - 1)
    def _finalize():
        denom = l_sc[...]
        safe = jnp.where(denom == 0.0, 1.0, denom)    # zero in-degree -> ft = 0
        out_ref[...] = acc_sc[...] * pl.reciprocal(safe) + bias_ref[...]


# --------------------------------- wrapper ---------------------------------- #
def gat_conv_edge_feat(src_feats, dst_feats, edge_feats, src_idx, dst_idx,
                       w_src_t, w_dst_t, bias, num_heads, out_feats,
                       edge_feat_mp_op="concat", tile_dst=128, tile_edge=512,
                       stream_dtype=jnp.float32):
    """Forward of GATConvwithEdgeFeat (feat_drop=attn_drop=0, activation=None)."""
    assert edge_feat_mp_op in ("concat", "add", "sub", "mul", "div")
    assert tile_dst % 8 == 0 and tile_edge % 8 == 0
    e = int(edge_feats.shape[0])
    n_dst = int(dst_feats.shape[0])
    f_in = int(src_feats.shape[1])
    f_dst = int(dst_feats.shape[1])
    assert int(edge_feats.shape[1]) == f_in
    ho = num_heads * out_feats

    if e == 0:   # module semantics: empty graph -> zeros (no bias)
        return jnp.zeros((n_dst, num_heads, out_feats), jnp.float32)

    # ---- glue (XLA): sort edges by dst, gather src rows, split fc_src weight ----
    order = jnp.argsort(dst_idx)
    src_s = src_idx[order]
    dst_s = dst_idx[order].astype(jnp.int32)
    ef_s = edge_feats[order]
    src_g = src_feats[src_s]                            # [E, F] gathered src rows

    if edge_feat_mp_op == "concat":
        assert w_src_t.shape == (2 * f_in, ho)
        w_a = w_src_t[:f_in].astype(jnp.float32)        # concat == split matmul
        w_b = w_src_t[f_in:].astype(jnp.float32)
    else:
        assert w_src_t.shape == (f_in, ho)
        w_a = w_src_t.astype(jnp.float32)
        w_b = w_a                                       # unused inside the kernel

    # ---- padding (no dropped tails) ----
    ep = pl.cdiv(e, tile_edge) * tile_edge
    ndp = pl.cdiv(n_dst, tile_dst) * tile_dst
    pad_val = 1.0 if edge_feat_mp_op == "div" else 0.0  # avoid 0/0 on padded rows
    src_g = jnp.pad(src_g.astype(stream_dtype), ((0, ep - e), (0, 0)))
    ef_s = jnp.pad(ef_s.astype(stream_dtype), ((0, ep - e), (0, 0)),
                   constant_values=pad_val)
    dst_col = jnp.pad(dst_s, (0, ep - e), constant_values=ndp).reshape(ep, 1)
    dstf = jnp.pad(dst_feats.astype(jnp.float32), ((0, ndp - n_dst), (0, 0)))
    bias2d = bias.reshape(1, ho).astype(jnp.float32)

    # ---- per-dst-tile edge-chunk schedule (scalar prefetch -> SMEM) ----
    counts = jnp.bincount(dst_s, length=ndp)
    off = jnp.concatenate([jnp.zeros((1,), jnp.int32),
                           jnp.cumsum(counts).astype(jnp.int32)])
    bounds = jnp.arange(0, ndp + 1, tile_dst)
    lo, hi = off[bounds[:-1]], off[bounds[1:]]
    c_total = ep // tile_edge
    chunk_start = jnp.clip(lo // tile_edge, 0, c_total - 1).astype(jnp.int32)
    chunk_end = jnp.clip((hi + tile_edge - 1) // tile_edge, 0, c_total)
    num_chunks = jnp.maximum(chunk_end - chunk_start, 1).astype(jnp.int32)
    n_tiles = ndp // tile_dst
    # Concrete here (wrapper is not jit-ed); under jit pad to a static bound.
    max_chunks = int(jax.device_get(jnp.max(num_chunks)))

    edge_map = lambda t, k, cs, nc: (cs[t] + jnp.minimum(k, nc[t] - 1), 0)
    tile_map = lambda t, k, cs, nc: (t, 0)
    const_map = lambda t, k, cs, nc: (0, 0)

    grid_spec = pltpu.PrefetchScalarGridSpec(
        num_scalar_prefetch=2,
        grid=(n_tiles, max_chunks),
        in_specs=[
            pl.BlockSpec((tile_edge, f_in), edge_map),    # gathered src feats
            pl.BlockSpec((tile_edge, f_in), edge_map),    # edge feats
            pl.BlockSpec((tile_edge, 1), edge_map),       # dst ids
            pl.BlockSpec((tile_dst, f_dst), tile_map),    # dst feats (per tile)
            pl.BlockSpec((f_in, ho), const_map),          # fc_src weight (part a)
            pl.BlockSpec((f_in, ho), const_map),          # fc_src weight (part b)
            pl.BlockSpec((f_dst, ho), const_map),         # fc_dst weight
            pl.BlockSpec((1, ho), const_map),             # bias
        ],
        out_specs=pl.BlockSpec((tile_dst, ho), tile_map),
        scratch_shapes=[pltpu.VMEM((tile_dst, ho), jnp.float32),   # n_h tile
                        pltpu.VMEM((1, ho), jnp.float32),          # running shift
                        pltpu.VMEM((tile_dst, ho), jnp.float32),   # softmax denom
                        pltpu.VMEM((tile_dst, ho), jnp.float32)],  # weighted acc
    )
    out = pl.pallas_call(
        functools.partial(_gat_fused_kernel, edge_feat_mp_op),
        out_shape=jax.ShapeDtypeStruct((ndp, ho), jnp.float32),
        grid_spec=grid_spec,
        compiler_params=pltpu.CompilerParams(
            dimension_semantics=("parallel", "arbitrary"),
            vmem_limit_bytes=_VMEM_LIMIT),
    )(chunk_start, num_chunks, src_g, ef_s, dst_col, dstf, w_a, w_b,
      w_dst_t.astype(jnp.float32), bias2d)

    # TODO(synk): when H*O < 128, pack several dst tiles along lanes for
    # lane-dense stores (configs with H*O >= 128 already store lane-dense).
    return out[:n_dst].reshape(n_dst, num_heads, out_feats)


# --------------------------- pure-JAX reference ------------------------------ #
def _reference(src_feats, dst_feats, edge_feats, src_idx, dst_idx,
               w_src_t, w_dst_t, bias, num_heads, out_feats, mp_op="concat"):
    n_dst = dst_feats.shape[0]
    sg = src_feats[src_idx]
    if mp_op == "concat":
        z = jnp.concatenate([sg, edge_feats], axis=-1)
    elif mp_op == "add":
        z = sg + edge_feats
    elif mp_op == "sub":
        z = sg - edge_feats
    elif mp_op == "mul":
        z = sg * edge_feats
    else:
        z = sg / edge_feats
    m = jnp.dot(z, w_src_t, precision=_HI)
    nh = jnp.dot(dst_feats, w_dst_t, precision=_HI)
    pre = m + nh[dst_idx]
    s = jnp.where(pre > 0, pre, NEG_SLOPE * pre)
    mx = jax.ops.segment_max(s, dst_idx, num_segments=n_dst)
    p = jnp.exp(s - mx[dst_idx])
    denom = jax.ops.segment_sum(p, dst_idx, num_segments=n_dst)
    alpha = p / denom[dst_idx]
    ft = jax.ops.segment_sum(alpha * m, dst_idx, num_segments=n_dst)
    return (ft + bias[None, :]).reshape(n_dst, num_heads, out_feats)


if __name__ == "__main__":
    F_IN, O, H = 16, 32, 4
    N_SRC, N_DST, E = 64, 96, 640
    HO = H * O

    key = jax.random.PRNGKey(0)
    ks = jax.random.split(key, 9)
    src_feats = jax.random.normal(ks[0], (N_SRC, F_IN), jnp.float32)
    dst_feats = jax.random.normal(ks[1], (N_DST, F_IN), jnp.float32)
    edge_feats = jax.random.normal(ks[2], (E, F_IN), jnp.float32)
    src_idx = jax.random.randint(ks[3], (E,), 0, N_SRC)
    dst_idx = jax.random.randint(ks[4], (E,), 0, N_DST)

    # Params mirroring reset_parameters() scales (xavier_normal, gain=sqrt(2));
    # bias made non-zero so the bias path is actually exercised.
    gain = 2.0 ** 0.5
    std_cat = gain * (2.0 / (2 * F_IN + HO)) ** 0.5      # fc_src (concat): in=2F
    std_src = gain * (2.0 / (F_IN + HO)) ** 0.5          # fc_src (add):    in=F
    std_dst = gain * (2.0 / (F_IN + HO)) ** 0.5          # fc_dst:          in=F
    w_src_cat_t = jax.random.normal(ks[5], (2 * F_IN, HO), jnp.float32) * std_cat
    w_src_add_t = jax.random.normal(ks[6], (F_IN, HO), jnp.float32) * std_src
    w_dst_t = jax.random.normal(ks[7], (F_IN, HO), jnp.float32) * std_dst
    bias = 0.1 * jax.random.normal(ks[8], (HO,), jnp.float32)

    # --- concat op, f32 streams, multi-tile / multi-chunk schedule ---
    ref = _reference(src_feats, dst_feats, edge_feats, src_idx, dst_idx,
                     w_src_cat_t, w_dst_t, bias, H, O, "concat")
    out = gat_conv_edge_feat(src_feats, dst_feats, edge_feats, src_idx, dst_idx,
                             w_src_cat_t, w_dst_t, bias, H, O,
                             edge_feat_mp_op="concat", tile_dst=64, tile_edge=128)
    out = jax.block_until_ready(out)
    assert out.shape == (N_DST, H, O)
    assert jnp.allclose(out, ref, atol=5e-3, rtol=5e-3), "concat f32 mismatch"

    # --- concat op, bf16 edge streams (halves the dominant HBM read) ---
    out_bf16 = gat_conv_edge_feat(src_feats, dst_feats, edge_feats, src_idx, dst_idx,
                                  w_src_cat_t, w_dst_t, bias, H, O,
                                  edge_feat_mp_op="concat",
                                  stream_dtype=jnp.bfloat16)
    out_bf16 = jax.block_until_ready(out_bf16)
    assert jnp.allclose(out_bf16, ref, atol=6e-2, rtol=6e-2), "concat bf16 mismatch"

    # --- add op (exercises the non-concat in-kernel combine branch) ---
    ref_add = _reference(src_feats, dst_feats, edge_feats, src_idx, dst_idx,
                         w_src_add_t, w_dst_t, bias, H, O, "add")
    out_add = gat_conv_edge_feat(src_feats, dst_feats, edge_feats, src_idx, dst_idx,
                                 w_src_add_t, w_dst_t, bias, H, O,
                                 edge_feat_mp_op="add", tile_dst=64, tile_edge=128)
    out_add = jax.block_until_ready(out_add)
    assert jnp.allclose(out_add, ref_add, atol=5e-3, rtol=5e-3), "add f32 mismatch"

    # TODO(synk): feat_drop/attn_drop (module defaults 0), optional activation
    # and the get_attention=True output are not implemented.
    print("KERNEL_OK")
</pallas_src>

<mosaic_0001>
module attributes {stable_mosaic.version = 11 : i64} {
  func.func @_gat_fused_kernel(%arg0: i32, %arg1: i32, %arg2: memref<2xi32, #tpu.memory_space<smem>>, %arg3: memref<2xi32, #tpu.memory_space<smem>>, %arg4: memref<128x16xf32, #tpu.memory_space<vmem>>, %arg5: memref<128x16xf32, #tpu.memory_space<vmem>>, %arg6: memref<128x1xi32, #tpu.memory_space<vmem>>, %arg7: memref<64x16xf32, #tpu.memory_space<vmem>>, %arg8: memref<16x128xf32, #tpu.memory_space<vmem>>, %arg9: memref<16x128xf32, #tpu.memory_space<vmem>>, %arg10: memref<16x128xf32, #tpu.memory_space<vmem>>, %arg11: memref<1x128xf32, #tpu.memory_space<vmem>>, %arg12: memref<64x128xf32, #tpu.memory_space<vmem>>, %arg13: memref<64x128xf32, #tpu.memory_space<vmem>>, %arg14: memref<1x128xf32, #tpu.memory_space<vmem>>, %arg15: memref<64x128xf32, #tpu.memory_space<vmem>>, %arg16: memref<64x128xf32, #tpu.memory_space<vmem>>) attributes {dimension_semantics = [#tpu.dimension_semantics<parallel>, #tpu.dimension_semantics<arbitrary>], iteration_bounds = array<i64: 2, 4>, scalar_prefetch = 2 : i64, scratch_operands = 4 : i64, tpu.core_type = #tpu.core_type<tc>, window_params = [{transform_indices = @transform_0, window_bounds = array<i64: 128, 16>}, {transform_indices = @transform_1, window_bounds = array<i64: 128, 16>}, {transform_indices = @transform_2, window_bounds = array<i64: 128, 1>}, {transform_indices = @transform_3, window_bounds = array<i64: 64, 16>}, {pipeline_mode = #tpu.pipeline_mode<synchronous>, transform_indices = @transform_4, window_bounds = array<i64: 16, 128>}, {pipeline_mode = #tpu.pipeline_mode<synchronous>, transform_indices = @transform_5, window_bounds = array<i64: 16, 128>}, {pipeline_mode = #tpu.pipeline_mode<synchronous>, transform_indices = @transform_6, window_bounds = array<i64: 16, 128>}, {pipeline_mode = #tpu.pipeline_mode<synchronous>, transform_indices = @transform_7, window_bounds = array<i64: 1, 128>}, {transform_indices = @transform_8, window_bounds = array<i64: 64, 128>}]} {
    %c0_i32 = arith.constant 0 : i32
    %0 = arith.cmpi eq, %arg1, %c0_i32 : i32
    %1 = arith.extui %0 : i1 to i32
    %c0_i32_0 = arith.constant 0 : i32
    %2 = arith.cmpi ne, %1, %c0_i32_0 : i32
    scf.if %2 {
      %c0 = arith.constant 0 : index
      %c0_3 = arith.constant 0 : index
      %11 = vector.load %arg7[%c0, %c0_3] : memref<64x16xf32, #tpu.memory_space<vmem>>, vector<64x16xf32>
      %c0_4 = arith.constant 0 : index
      %c0_5 = arith.constant 0 : index
      %12 = vector.load %arg10[%c0_4, %c0_5] : memref<16x128xf32, #tpu.memory_space<vmem>>, vector<16x128xf32>
      %cst = arith.constant dense<0.000000e+00> : vector<64x128xf32>
      %13 = tpu.matmul %11, %12, %cst {dimension_numbers = #tpu.dot_dimension_numbers<[1], [0], [0], [1], [0, 0, 1, 1], [], []>} : vector<64x16xf32>, vector<16x128xf32>, vector<64x128xf32> -> vector<64x128xf32>
      %c0_6 = arith.constant 0 : index
      %c0_7 = arith.constant 0 : index
      %14 = vector.load %arg13[%c0_6, %c0_7] : memref<64x128xf32, #tpu.memory_space<vmem>>, vector<64x128xf32>
      tpu.vector_store %arg13[%c0_6, %c0_7], %13 {strides = array<i32>} : memref<64x128xf32, #tpu.memory_space<vmem>>, vector<64x128xf32>,
      %cst_8 = arith.constant -1.000000e+30 : f32
      %15 = vector.broadcast %cst_8 : f32 to vector<1x128xf32>
      %c0_9 = arith.constant 0 : index
      %c0_10 = arith.constant 0 : index
      %16 = vector.load %arg14[%c0_9, %c0_10] : memref<1x128xf32, #tpu.memory_space<vmem>>, vector<1x128xf32>
      tpu.vector_store %arg14[%c0_9, %c0_10], %15 {strides = array<i32>} : memref<1x128xf32, #tpu.memory_space<vmem>>, vector<1x128xf32>,
      %cst_11 = arith.constant 0.000000e+00 : f32
      %17 = vector.broadcast %cst_11 : f32 to vector<64x128xf32>
      %c0_12 = arith.constant 0 : index
      %c0_13 = arith.constant 0 : index
      %18 = vector.load %arg15[%c0_12, %c0_13] : memref<64x128xf32, #tpu.memory_space<vmem>>, vector<64x128xf32>
      tpu.vector_store %arg15[%c0_12, %c0_13], %17 {strides = array<i32>} : memref<64x128xf32, #tpu.memory_space<vmem>>, vector<64x128xf32>,
      %cst_14 = arith.constant 0.000000e+00 : f32
      %19 = vector.broadcast %cst_14 : f32 to vector<64x128xf32>
      %c0_15 = arith.constant 0 : index
      %c0_16 = arith.constant 0 : index
      %20 = vector.load %arg16[%c0_15, %c0_16] : memref<64x128xf32, #tpu.memory_space<vmem>>, vector<64x128xf32>
      tpu.vector_store %arg16[%c0_15, %c0_16], %19 {strides = array<i32>} : memref<64x128xf32, #tpu.memory_space<vmem>>, vector<64x128xf32>,
    } else {
    }
    %3 = arith.index_cast %arg0 : i32 to index
    %4 = memref.load %arg3[%3] : memref<2xi32, #tpu.memory_space<smem>>
    %5 = arith.cmpi slt, %arg1, %4 : i32
    %6 = arith.extui %5 : i1 to i32
    %c0_i32_1 = arith.constant 0 : i32
    %7 = arith.cmpi ne, %6, %c0_i32_1 : i32
    scf.if %7 {
      %c0 = arith.constant 0 : index
      %c0_3 = arith.constant 0 : index
      %11 = vector.load %arg4[%c0, %c0_3] : memref<128x16xf32, #tpu.memory_space<vmem>>, vector<128x16xf32>
      %c0_4 = arith.constant 0 : index
      %c0_5 = arith.constant 0 : index
      %12 = vector.load %arg5[%c0_4, %c0_5] : memref<128x16xf32, #tpu.memory_space<vmem>>, vector<128x16xf32>
      %c0_6 = arith.constant 0 : index
      %c0_7 = arith.constant 0 : index
      %13 = vector.load %arg8[%c0_6, %c0_7] : memref<16x128xf32, #tpu.memory_space<vmem>>, vector<16x128xf32>
      %cst = arith.constant dense<0.000000e+00> : vector<128x128xf32>
      %14 = tpu.matmul %11, %13, %cst {dimension_numbers = #tpu.dot_dimension_numbers<[1], [0], [0], [1], [0, 0, 1, 1], [], []>} : vector<128x16xf32>, vector<16x128xf32>, vector<128x128xf32> -> vector<128x128xf32>
      %c0_8 = arith.constant 0 : index
      %c0_9 = arith.constant 0 : index
      %15 = vector.load %arg9[%c0_8, %c0_9] : memref<16x128xf32, #tpu.memory_space<vmem>>, vector<16x128xf32>
      %cst_10 = arith.constant dense<0.000000e+00> : vector<128x128xf32>
      %16 = tpu.matmul %12, %15, %cst_10 {dimension_numbers = #tpu.dot_dimension_numbers<[1], [0], [0], [1], [0, 0, 1, 1], [], []>} : vector<128x16xf32>, vector<16x128xf32>, vector<128x128xf32> -> vector<128x128xf32>
      %17 = arith.addf %14, %16 : vector<128x128xf32>
      %c0_11 = arith.constant 0 : index
      %c0_12 = arith.constant 0 : index
      %18 = vector.load %arg6[%c0_11, %c0_12] : memref<128x1xi32, #tpu.memory_space<vmem>>, vector<128x1xi32>
      %19 = tpu.iota {dimensions = array<i32: 1>} : vector<128x64xi32>
      %c64_i32 = arith.constant 64 : i32
      %20 = arith.muli %arg0, %c64_i32 : i32
      %21 = vector.broadcast %20 : i32 to vector<128x64xi32>
      %22 = arith.addi %19, %21 : vector<128x64xi32>
      %23 = vector.broadcast %18 : vector<128x1xi32> to vector<128x64xi32>
      %24 = arith.cmpi eq, %23, %22 : vector<128x64xi32>
      %25 = arith.extui %24 : vector<128x64xi1> to vector<128x64xi32>
      %26 = arith.sitofp %25 : vector<128x64xi32> to vector<128x64xf32>
      %c0_13 = arith.constant 0 : index
      %c0_14 = arith.constant 0 : index
      %27 = vector.load %arg13[%c0_13, %c0_14] : memref<64x128xf32, #tpu.memory_space<vmem>>, vector<64x128xf32>
      %cst_15 = arith.constant dense<0.000000e+00> : vector<128x128xf32>
      %28 = tpu.matmul %26, %27, %cst_15 {dimension_numbers = #tpu.dot_dimension_numbers<[1], [0], [0], [1], [0, 0, 1, 1], [], []>} : vector<128x64xf32>, vector<64x128xf32>, vector<128x128xf32> -> vector<128x128xf32>
      %29 = arith.addf %17, %28 : vector<128x128xf32>
      %cst_16 = arith.constant 0.000000e+00 : f32
      %30 = vector.broadcast %cst_16 : f32 to vector<128x128xf32>
      %31 = arith.cmpf ogt, %29, %30 : vector<128x128xf32>
      %cst_17 = arith.constant 2.000000e-01 : f32
      %32 = vector.broadcast %cst_17 : f32 to vector<128x128xf32>
      %33 = arith.mulf %32, %29 : vector<128x128xf32>
      %34 = arith.select %31, %29, %33 : vector<128x128xi1>, vector<128x128xf32>
      %c0_18 = arith.constant 0 : index
      %c0_19 = arith.constant 0 : index
      %35 = vector.load %arg14[%c0_18, %c0_19] : memref<1x128xf32, #tpu.memory_space<vmem>>, vector<1x128xf32>
      %cst_20 = arith.constant dense<0xFF800000> : vector<128xf32>
      %36 = vector.multi_reduction <maximumf>, %34, %cst_20 [0] : vector<128x128xf32> to vector<128xf32>
      %37 = vector.shape_cast %36 : vector<128xf32> to vector<1x128xf32>
      %38 = arith.maximumf %35, %37 : vector<1x128xf32>
      %c0_21 = arith.constant 0 : index
      %c0_22 = arith.constant 0 : index
      %39 = vector.load %arg14[%c0_21, %c0_22] : memref<1x128xf32, #tpu.memory_space<vmem>>, vector<1x128xf32>
      %40 = arith.subf %39, %38 : vector<1x128xf32>
      %41 = math.exp %40 : vector<1x128xf32>
      %42 = vector.broadcast %38 : vector<1x128xf32> to vector<128x128xf32>
      %43 = arith.subf %34, %42 : vector<128x128xf32>
      %44 = math.exp %43 : vector<128x128xf32>
      %c0_23 = arith.constant 0 : index
      %c0_24 = arith.constant 0 : index
      %45 = vector.load %arg15[%c0_23, %c0_24] : memref<64x128xf32, #tpu.memory_space<vmem>>, vector<64x128xf32>
      %46 = vector.broadcast %41 : vector<1x128xf32> to vector<64x128xf32>
      %47 = arith.mulf %45, %46 : vector<64x128xf32>
      %cst_25 = arith.constant dense<0.000000e+00> : vector<64x128xf32>
      %48 = tpu.matmul %26, %44, %cst_25 {dimension_numbers = #tpu.dot_dimension_numbers<[0], [0], [1], [1], [0, 1, 1, 1], [], []>} : vector<128x64xf32>, vector<128x128xf32>, vector<64x128xf32> -> vector<64x128xf32>
      %49 = arith.addf %47, %48 : vector<64x128xf32>
      %c0_26 = arith.constant 0 : index
      %c0_27 = arith.constant 0 : index
      %50 = vector.load %arg15[%c0_26, %c0_27] : memref<64x128xf32, #tpu.memory_space<vmem>>, vector<64x128xf32>
      tpu.vector_store %arg15[%c0_26, %c0_27], %49 {strides = array<i32>} : memref<64x128xf32, #tpu.memory_space<vmem>>, vector<64x128xf32>,
      %c0_28 = arith.constant 0 : index
      %c0_29 = arith.constant 0 : index
      %51 = vector.load %arg16[%c0_28, %c0_29] : memref<64x128xf32, #tpu.memory_space<vmem>>, vector<64x128xf32>
      %52 = vector.broadcast %41 : vector<1x128xf32> to vector<64x128xf32>
      %53 = arith.mulf %51, %52 : vector<64x128xf32>
      %54 = arith.mulf %44, %17 : vector<128x128xf32>
      %cst_30 = arith.constant dense<0.000000e+00> : vector<64x128xf32>
      %55 = tpu.matmul %26, %54, %cst_30 {dimension_numbers = #tpu.dot_dimension_numbers<[0], [0], [1], [1], [0, 1, 1, 1], [], []>} : vector<128x64xf32>, vector<128x128xf32>, vector<64x128xf32> -> vector<64x128xf32>
      %56 = arith.addf %53, %55 : vector<64x128xf32>
      %c0_31 = arith.constant 0 : index
      %c0_32 = arith.constant 0 : index
      %57 = vector.load %arg16[%c0_31, %c0_32] : memref<64x128xf32, #tpu.memory_space<vmem>>, vector<64x128xf32>
      tpu.vector_store %arg16[%c0_31, %c0_32], %56 {strides = array<i32>} : memref<64x128xf32, #tpu.memory_space<vmem>>, vector<64x128xf32>,
      %c0_33 = arith.constant 0 : index
      %c0_34 = arith.constant 0 : index
      %58 = vector.load %arg14[%c0_33, %c0_34] : memref<1x128xf32, #tpu.memory_space<vmem>>, vector<1x128xf32>
      tpu.vector_store %arg14[%c0_33, %c0_34], %38 {strides = array<i32>} : memref<1x128xf32, #tpu.memory_space<vmem>>, vector<1x128xf32>,
    } else {
    }
    %c3_i32 = arith.constant 3 : i32
    %8 = arith.cmpi eq, %arg1, %c3_i32 : i32
    %9 = arith.extui %8 : i1 to i32
    %c0_i32_2 = arith.constant 0 : i32
    %10 = arith.cmpi ne, %9, %c0_i32_2 : i32
    scf.if %10 {
      %c0 = arith.constant 0 : index
      %c0_3 = arith.constant 0 : index
      %11 = vector.load %arg15[%c0, %c0_3] : memref<64x128xf32, #tpu.memory_space<vmem>>, vector<64x128xf32>
      %cst = arith.constant 0.000000e+00 : f32
      %12 = vector.broadcast %cst : f32 to vector<64x128xf32>
      %13 = arith.cmpf oeq, %11, %12 : vector<64x128xf32>
      %cst_4 = arith.constant 1.000000e+00 : f32
      %14 = vector.broadcast %cst_4 : f32 to vector<64x128xf32>
      %15 = arith.select %13, %14, %11 : vector<64x128xi1>, vector<64x128xf32>
      %c0_5 = arith.constant 0 : index
      %c0_6 = arith.constant 0 : index
      %16 = vector.load %arg16[%c0_5, %c0_6] : memref<64x128xf32, #tpu.memory_space<vmem>>, vector<64x128xf32>
      %17 = tpu.reciprocal %15 : vector<64x128xf32> -> vector<64x128xf32>
      %18 = arith.mulf %16, %17 : vector<64x128xf32>
      %c0_7 = arith.constant 0 : index
      %c0_8 = arith.constant 0 : index
      %19 = vector.load %arg11[%c0_7, %c0_8] : memref<1x128xf32, #tpu.memory_space<vmem>>, vector<1x128xf32>
      %20 = vector.broadcast %19 : vector<1x128xf32> to vector<64x128xf32>
      %21 = arith.addf %18, %20 : vector<64x128xf32>
      %c0_9 = arith.constant 0 : index
      %c0_10 = arith.constant 0 : index
      %22 = vector.load %arg12[%c0_9, %c0_10] : memref<64x128xf32, #tpu.memory_space<vmem>>, vector<64x128xf32>
      tpu.vector_store %arg12[%c0_9, %c0_10], %21 {strides = array<i32>} : memref<64x128xf32, #tpu.memory_space<vmem>>, vector<64x128xf32>,
    } else {
    }
    return
  }
  func.func @transform_0(%arg0: i32, %arg1: i32, %arg2: memref<2xi32, #tpu.memory_space<smem>>, %arg3: memref<2xi32, #tpu.memory_space<smem>>) -> (i32, i32) {
    %0 = arith.index_cast %arg0 : i32 to index
    %1 = memref.load %arg2[%0] : memref<2xi32, #tpu.memory_space<smem>>
    %2 = arith.index_cast %arg0 : i32 to index
    %3 = memref.load %arg3[%2] : memref<2xi32, #tpu.memory_space<smem>>
    %c1_i32 = arith.constant 1 : i32
    %4 = arith.subi %3, %c1_i32 : i32
    %5 = arith.minsi %arg1, %4 : i32
    %6 = arith.addi %1, %5 : i32
    %c0_i32 = arith.constant 0 : i32
    %c0_i32_0 = arith.constant 0 : i32
    return %6, %c0_i32 : i32, i32
  }
  func.func @transform_1(%arg0: i32, %arg1: i32, %arg2: memref<2xi32, #tpu.memory_space<smem>>, %arg3: memref<2xi32, #tpu.memory_space<smem>>) -> (i32, i32) {
    %0 = arith.index_cast %arg0 : i32 to index
    %1 = memref.load %arg2[%0] : memref<2xi32, #tpu.memory_space<smem>>
    %2 = arith.index_cast %arg0 : i32 to index
    %3 = memref.load %arg3[%2] : memref<2xi32, #tpu.memory_space<smem>>
    %c1_i32 = arith.constant 1 : i32
    %4 = arith.subi %3, %c1_i32 : i32
    %5 = arith.minsi %arg1, %4 : i32
    %6 = arith.addi %1, %5 : i32
    %c0_i32 = arith.constant 0 : i32
    %c0_i32_0 = arith.constant 0 : i32
    return %6, %c0_i32 : i32, i32
  }
  func.func @transform_2(%arg0: i32, %arg1: i32, %arg2: memref<2xi32, #tpu.memory_space<smem>>, %arg3: memref<2xi32, #tpu.memory_space<smem>>) -> (i32, i32) {
    %0 = arith.index_cast %arg0 : i32 to index
    %1 = memref.load %arg2[%0] : memref<2xi32, #tpu.memory_space<smem>>
    %2 = arith.index_cast %arg0 : i32 to index
    %3 = memref.load %arg3[%2] : memref<2xi32, #tpu.memory_space<smem>>
    %c1_i32 = arith.constant 1 : i32
    %4 = arith.subi %3, %c1_i32 : i32
    %5 = arith.minsi %arg1, %4 : i32
    %6 = arith.addi %1, %5 : i32
    %c0_i32 = arith.constant 0 : i32
    %c0_i32_0 = arith.constant 0 : i32
    return %6, %c0_i32 : i32, i32
  }
  func.func @transform_3(%arg0: i32, %arg1: i32, %arg2: memref<2xi32, #tpu.memory_space<smem>>, %arg3: memref<2xi32, #tpu.memory_space<smem>>) -> (i32, i32) {
    %c0_i32 = arith.constant 0 : i32
    %c0_i32_0 = arith.constant 0 : i32
    return %arg0, %c0_i32 : i32, i32
  }
  func.func @transform_4(%arg0: i32, %arg1: i32, %arg2: memref<2xi32, #tpu.memory_space<smem>>, %arg3: memref<2xi32, #tpu.memory_space<smem>>) -> (i32, i32) {
    %c0_i32 = arith.constant 0 : i32
    %c0_i32_0 = arith.constant 0 : i32
    %c0_i32_1 = arith.constant 0 : i32
    return %c0_i32, %c0_i32_0 : i32, i32
  }
  func.func @transform_5(%arg0: i32, %arg1: i32, %arg2: memref<2xi32, #tpu.memory_space<smem>>, %arg3: memref<2xi32, #tpu.memory_space<smem>>) -> (i32, i32) {
    %c0_i32 = arith.constant 0 : i32
    %c0_i32_0 = arith.constant 0 : i32
    %c0_i32_1 = arith.constant 0 : i32
    return %c0_i32, %c0_i32_0 : i32, i32
  }
  func.func @transform_6(%arg0: i32, %arg1: i32, %arg2: memref<2xi32, #tpu.memory_space<smem>>, %arg3: memref<2xi32, #tpu.memory_space<smem>>) -> (i32, i32) {
    %c0_i32 = arith.constant 0 : i32
    %c0_i32_0 = arith.constant 0 : i32
    %c0_i32_1 = arith.constant 0 : i32
    return %c0_i32, %c0_i32_0 : i32, i32
  }
  func.func @transform_7(%arg0: i32, %arg1: i32, %arg2: memref<2xi32, #tpu.memory_space<smem>>, %arg3: memref<2xi32, #tpu.memory_space<smem>>) -> (i32, i32) {
    %c0_i32 = arith.constant 0 : i32
    %c0_i32_0 = arith.constant 0 : i32
    %c0_i32_1 = arith.constant 0 : i32
    return %c0_i32, %c0_i32_0 : i32, i32
  }
  func.func @transform_8(%arg0: i32, %arg1: i32, %arg2: memref<2xi32, #tpu.memory_space<smem>>, %arg3: memref<2xi32, #tpu.memory_space<smem>>) -> (i32, i32) {
    %c0_i32 = arith.constant 0 : i32
    %c0_i32_0 = arith.constant 0 : i32
    return %arg0, %c0_i32 : i32, i32
  }
}

</mosaic_0001>

<llo_original>
// kernel: tpu_custom_call.1
$region0: #{tpu_custom_call.1}
  #allocation0 [shape = 'u32[]', space=smem, size = 0x4, offset = 0x4, fixed_abs, tag = 'smem constant byte address 0x4 - core index']
  #allocation1 [shape = 'u32[144,128]{1,0:T(1,128)}', space=vmem, size = 0x12000, scoped, tag = 'internal scratch']
  #allocation2 [shape = 'f32[64,128]{1,0:T(8,128)}', space=vmem, size = 0x8000, scoped, tag = 'scratch operand']
  #allocation3 [shape = 'f32[1,128]{1,0:T(1,128)}', space=vmem, size = 0x200, scoped, tag = 'scratch operand']
  #allocation4 [shape = 'f32[64,128]{1,0:T(8,128)}', space=vmem, size = 0x8000, scoped, tag = 'scratch operand']
  #allocation5 [shape = 'f32[64,128]{1,0:T(8,128)}', space=vmem, size = 0x8000, scoped, tag = 'scratch operand']
  #allocation6 [shape = 's32[1]{0}', space=sflag, size = 0x4, scoped, tag = 'scoped memory for tpu_custom_call.1']
  #allocation7 [shape = 'u8[512]{0}', space=smem, size = 0x200, scoped, tag = 'prefetched SMEM operand 0']
  #allocation8 [shape = 'u8[512]{0}', space=smem, size = 0x200, scoped, tag = 'prefetched SMEM operand 1']
  %s0 = inlined_call_operand.vmem [shape: s32[2], index: 0, kind: input, shape index: {}]
  %s1 = inlined_call_operand.vmem [shape: s32[2], index: 1, kind: input, shape index: {}]
  %s2 = inlined_call_operand.vmem [shape: f32[640,16], index: 2, kind: input, shape index: {}]
  %s3 = inlined_call_operand.vmem [shape: f32[640,16], index: 3, kind: input, shape index: {}]
  %s4 = inlined_call_operand.vmem [shape: s32[640,1], index: 4, kind: input, shape index: {}]
  %s5 = inlined_call_operand.vmem [shape: f32[128,16], index: 5, kind: input, shape index: {}]
  %s6 = inlined_call_operand.vmem [shape: f32[16,128], index: 6, kind: input, shape index: {}]
  %s7 = inlined_call_operand.vmem [shape: f32[16,128], index: 7, kind: input, shape index: {}]
  %s8 = inlined_call_operand.vmem [shape: f32[16,128], index: 8, kind: input, shape index: {}]
  %s9 = inlined_call_operand.vmem [shape: f32[1,128], index: 9, kind: input, shape index: {}]
  %s10 = inlined_call_operand.hbm [shape: f32[128,128], index: 10, kind: output, shape index: {}]
  %s11 = sld [smem:[#allocation0]]
  $region77: #{tpu_custom_call.1} parent=0
    _
  %s13 = ssub.s32 1, %s11
  %s14 = scalar_select 0, %s13, %s11
  %s15 = sshll.u32 %s0, 4
  %s16 = int_to_ptr.vmem [resolvable:$true] %s15
  %18 = dma.vmem_to_smem %s16, 16, [#allocation7], [#allocation6]
  %s19 = sshll.u32 %s1, 4
  %s20 = int_to_ptr.vmem [resolvable:$true] %s19
  %22 = dma.vmem_to_smem %s20, 16, [#allocation8], [#allocation6]
  %23 = dma.done [#allocation6], 32
  %24 = sfence
  $region1: #{tpu_custom_call.1} parent=0
    #allocation9 [shape = 'u8[65536]{0}', space=vmem, size = 0x10000, scoped, tag = 'output window, operand 0']
    #allocation10 [shape = 's32[2]{0}', space=sflag, size = 0x8, scoped, tag = 'scoped memory for tpu_custom_call.1']
    %25 = vsyncpa [#allocation10], 0
    %s26 = scalar_lea.sflag [#allocation10], 1
    %27 = vsyncpa %s26, 0
    loop: start=0, step=1, limit=10
    $region2: #{tpu_custom_call.1} parent=1 // loop_pre_header
      _
    $region3: #{tpu_custom_call.1} parent=1 // loop_header
      %s29 = sphi 0, %s33
      %p30 = scmp.ge.s32.totalorder %s29, 10
      %s36 = sphi 0, %s48
      %s37 = sphi 0, %s44
      %s38 = sphi 0, %s36
      %s39 = sphi 0, %s37
      %s40 = sphi 0, %s38
      %s41 = sphi 0, %s39
      %s63 = sphi 0, %s65
      %s66 = sphi 0, %s63
      %s67 = sphi 0, %s66
      %s83 = sphi 0, %s67
      %s101 = sphi 0, %s103
      %s104 = sphi 0, %s101
      %s105 = sphi 0, %s104
      %s121 = sphi 0, %s105
      %s139 = sphi 0, %s141
      %s142 = sphi 0, %s139
      %s143 = sphi 0, %s142
      %s159 = sphi 0, %s143
      %s165 = sphi 0, %s167
      %s168 = sphi 0, %s165
      %s169 = sphi 0, %s168
      %s185 = sphi 0, %s169
      %s189 = sphi 0, %s189
      %s191 = sphi 0, %s189
      %s192 = sphi 0, %s191
      %s206 = sphi 0, %s192
      %s210 = sphi 0, %s210
      %s212 = sphi 0, %s210
      %s213 = sphi 0, %s212
      %s227 = sphi 0, %s213
      %s231 = sphi 0, %s231
      %s233 = sphi 0, %s231
      %s234 = sphi 0, %s233
      %s248 = sphi 0, %s234
      %s252 = sphi 0, %s252
      %s254 = sphi 0, %s252
      %s255 = sphi 0, %s254
      %s269 = sphi 0, %s255
      %s275 = sphi 0, %s277
      %s278 = sphi 0, %s275
      %s279 = sphi 0, %s278
      %s295 = sphi 0, %s279
    $region4: #{tpu_custom_call.1} parent=1 // loop_header_branch
      %32 = sbr.rel (%p30) target = $region8
    $region5: #{tpu_custom_call.1} parent=1 // loop_body
      %s34 = ssub.s32 %s29, 1
      %s35 = ssub.s32 %s29, 2
      %s42 = sadd.s32 1, %s37
      %p43 = scmp.ge.s32.totalorder %s42, 4
      %s44 = scalar_select %p43, 0, %s42
      %s45 = sadd.s32 1, %s36
      %s46 = scalar_select %p43, %s45, %s36
      %p47 = scmp.ge.s32.totalorder %s46, 2
      %s48 = scalar_select %p47, 0, %s46
      %s49 = sld [smem:[#allocation7 + %s36]]
      %s50 = sld [smem:[#allocation8 + %s36]]
      %s51 = ssub.s32 %s50, 1
      %p52 = scmp.lt.s32.totalorder %s37, %s51
      %s53 = scalar_select %p52, %s37, %s51
      %s54 = sadd.s32 %s49, %s53
      %s55 = sld [smem:[#allocation7 + %s48]]
      %s56 = sld [smem:[#allocation8 + %s48]]
      %s57 = ssub.s32 %s56, 1
      %p58 = scmp.lt.s32.totalorder %s44, %s57
      %s59 = scalar_select %p58, %s44, %s57
      %s60 = sadd.s32 %s55, %s59
      %s61 = ssub.s32 %s54, %s60
      %p62 = scmp.eq.s32.totalorder %s61, 0
      %s64 = sadd.s32 %s63, 1
      %s65 = scalar_select %p62, %s63, %s64
      %p68 = pneg %p62
      %p69 = scmp.eq.s32.totalorder %s29, 7
      %p70 = por %p68, %p69
      %p71 = scmp.ne.s32.totalorder %s63, %s66
      %p72 = scmp.eq.s32.totalorder %s29, 0
      %p73 = por %p71, %p72
      %p74 = scmp.ne.s32.totalorder %s63, %s66
      %p75 = scmp.eq.s32.totalorder %s34, 7
      %p76 = por %p74, %p75
      %p77 = scmp.ne.s32.totalorder %s66, %s67
      %p78 = scmp.eq.s32.totalorder %s34, 0
      %p79 = por %p77, %p78
      %p80 = scmp.ne.s32.totalorder %s66, %s67
      %p81 = scmp.eq.s32.totalorder %s35, 7
      %p82 = por %p80, %p81
      %p84 = scmp.ne.s32.totalorder %s67, %s83
      %p85 = scmp.eq.s32.totalorder %s35, 0
      %p86 = por %p84, %p85
      %s87 = sld [smem:[#allocation7 + %s36]]
      %s88 = sld [smem:[#allocation8 + %s36]]
      %s89 = ssub.s32 %s88, 1
      %p90 = scmp.lt.s32.totalorder %s37, %s89
      %s91 = scalar_select %p90, %s37, %s89
      %s92 = sadd.s32 %s87, %s91
      %s93 = sld [smem:[#allocation7 + %s48]]
      %s94 = sld [smem:[#allocation8 + %s48]]
      %s95 = ssub.s32 %s94, 1
      %p96 = scmp.lt.s32.totalorder %s44, %s95
      %s97 = scalar_select %p96, %s44, %s95
      %s98 = sadd.s32 %s93, %s97
      %s99 = ssub.s32 %s92, %s98
      %p100 = scmp.eq.s32.totalorder %s99, 0
      %s102 = sadd.s32 %s101, 1
      %s103 = scalar_select %p100, %s101, %s102
      %p106 = pneg %p100
      %p107 = scmp.eq.s32.totalorder %s29, 7
      %p108 = por %p106, %p107
      %p109 = scmp.ne.s32.totalorder %s101, %s104
      %p110 = scmp.eq.s32.totalorder %s29, 0
      %p111 = por %p109, %p110
      %p112 = scmp.ne.s32.totalorder %s101, %s104
      %p113 = scmp.eq.s32.totalorder %s34, 7
      %p114 = por %p112, %p113
      %p115 = scmp.ne.s32.totalorder %s104, %s105
      %p116 = scmp.eq.s32.totalorder %s34, 0
      %p117 = por %p115, %p116
      %p118 = scmp.ne.s32.totalorder %s104, %s105
      %p119 = scmp.eq.s32.totalorder %s35, 7
      %p120 = por %p118, %p119
      %p122 = scmp.ne.s32.totalorder %s105, %s121
      %p123 = scmp.eq.s32.totalorder %s35, 0
      %p124 = por %p122, %p123
      %s125 = sld [smem:[#allocation7 + %s36]]
      %s126 = sld [smem:[#allocation8 + %s36]]
      %s127 = ssub.s32 %s126, 1
      %p128 = scmp.lt.s32.totalorder %s37, %s127
      %s129 = scalar_select %p128, %s37, %s127
      %s130 = sadd.s32 %s125, %s129
      %s131 = sld [smem:[#allocation7 + %s48]]
      %s132 = sld [smem:[#allocation8 + %s48]]
      %s133 = ssub.s32 %s132, 1
      %p134 = scmp.lt.s32.totalorder %s44, %s133
      %s135 = scalar_select %p134, %s44, %s133
      %s136 = sadd.s32 %s131, %s135
      %s137 = ssub.s32 %s130, %s136
      %p138 = scmp.eq.s32.totalorder %s137, 0
      %s140 = sadd.s32 %s139, 1
      %s141 = scalar_select %p138, %s139, %s140
      %p144 = pneg %p138
      %p145 = scmp.eq.s32.totalorder %s29, 7
      %p146 = por %p144, %p145
      %p147 = scmp.ne.s32.totalorder %s139, %s142
      %p148 = scmp.eq.s32.totalorder %s29, 0
      %p149 = por %p147, %p148
      %p150 = scmp.ne.s32.totalorder %s139, %s142
      %p151 = scmp.eq.s32.totalorder %s34, 7
      %p152 = por %p150, %p151
      %p153 = scmp.ne.s32.totalorder %s142, %s143
      %p154 = scmp.eq.s32.totalorder %s34, 0
      %p155 = por %p153, %p154
      %p156 = scmp.ne.s32.totalorder %s142, %s143
      %p157 = scmp.eq.s32.totalorder %s35, 7
      %p158 = por %p156, %p157
      %p160 = scmp.ne.s32.totalorder %s143, %s159
      %p161 = scmp.eq.s32.totalorder %s35, 0
      %p162 = por %p160, %p161
      %s163 = ssub.s32 %s36, %s48
      %p164 = scmp.eq.s32.totalorder %s163, 0
      %s166 = sadd.s32 %s165, 1
      %s167 = scalar_select %p164, %s165, %s166
      %p170 = pneg %p164
      %p171 = scmp.eq.s32.totalorder %s29, 7
      %p172 = por %p170, %p171
      %p173 = scmp.ne.s32.totalorder %s165, %s168
      %p174 = scmp.eq.s32.totalorder %s29, 0
      %p175 = por %p173, %p174
      %p176 = scmp.ne.s32.totalorder %s165, %s168
      %p177 = scmp.eq.s32.totalorder %s34, 7
      %p178 = por %p176, %p177
      %p179 = scmp.ne.s32.totalorder %s168, %s169
      %p180 = scmp.eq.s32.totalorder %s34, 0
      %p181 = por %p179, %p180
      %p182 = scmp.ne.s32.totalorder %s168, %s169
      %p183 = scmp.eq.s32.totalorder %s35, 7
      %p184 = por %p182, %p183
      %p186 = scmp.ne.s32.totalorder %s169, %s185
      %p187 = scmp.eq.s32.totalorder %s35, 0
      %p188 = por %p186, %p187
      %s190 = sadd.s32 %s189, 1
      %p193 = scmp.eq.s32.totalorder %s29, 7
      %p194 = scmp.ne.s32.totalorder %s189, %s191
      %p195 = scmp.eq.s32.totalorder %s29, 0
      %p196 = por %p194, %p195
      %p197 = scmp.ne.s32.totalorder %s189, %s191
      %p198 = scmp.eq.s32.totalorder %s34, 7
      %p199 = por %p197, %p198
      %p200 = scmp.ne.s32.totalorder %s191, %s192
      %p201 = scmp.eq.s32.totalorder %s34, 0
      %p202 = por %p200, %p201
      %p203 = scmp.ne.s32.totalorder %s191, %s192
      %p204 = scmp.eq.s32.totalorder %s35, 7
      %p205 = por %p203, %p204
      %p207 = scmp.ne.s32.totalorder %s192, %s206
      %p208 = scmp.eq.s32.totalorder %s35, 0
      %p209 = por %p207, %p208
      %s211 = sadd.s32 %s210, 1
      %p214 = scmp.eq.s32.totalorder %s29, 7
      %p215 = scmp.ne.s32.totalorder %s210, %s212
      %p216 = scmp.eq.s32.totalorder %s29, 0
      %p217 = por %p215, %p216
      %p218 = scmp.ne.s32.totalorder %s210, %s212
      %p219 = scmp.eq.s32.totalorder %s34, 7
      %p220 = por %p218, %p219
      %p221 = scmp.ne.s32.totalorder %s212, %s213
      %p222 = scmp.eq.s32.totalorder %s34, 0
      %p223 = por %p221, %p222
      %p224 = scmp.ne.s32.totalorder %s212, %s213
      %p225 = scmp.eq.s32.totalorder %s35, 7
      %p226 = por %p224, %p225
      %p228 = scmp.ne.s32.totalorder %s213, %s227
      %p229 = scmp.eq.s32.totalorder %s35, 0
      %p230 = por %p228, %p229
      %s232 = sadd.s32 %s231, 1
      %p235 = scmp.eq.s32.totalorder %s29, 7
      %p236 = scmp.ne.s32.totalorder %s231, %s233
      %p237 = scmp.eq.s32.totalorder %s29, 0
      %p238 = por %p236, %p237
      %p239 = scmp.ne.s32.totalorder %s231, %s233
      %p240 = scmp.eq.s32.totalorder %s34, 7
      %p241 = por %p239, %p240
      %p242 = scmp.ne.s32.totalorder %s233, %s234
      %p243 = scmp.eq.s32.totalorder %s34, 0
      %p244 = por %p242, %p243
      %p245 = scmp.ne.s32.totalorder %s233, %s234
      %p246 = scmp.eq.s32.totalorder %s35, 7
      %p247 = por %p245, %p246
      %p249 = scmp.ne.s32.totalorder %s234, %s248
      %p250 = scmp.eq.s32.totalorder %s35, 0
      %p251 = por %p249, %p250
      %s253 = sadd.s32 %s252, 1
      %p256 = scmp.eq.s32.totalorder %s29, 7
      %p257 = scmp.ne.s32.totalorder %s252, %s254
      %p258 = scmp.eq.s32.totalorder %s29, 0
      %p259 = por %p257, %p258
      %p260 = scmp.ne.s32.totalorder %s252, %s254
      %p261 = scmp.eq.s32.totalorder %s34, 7
      %p262 = por %p260, %p261
      %p263 = scmp.ne.s32.totalorder %s254, %s255
      %p264 = scmp.eq.s32.totalorder %s34, 0
      %p265 = por %p263, %p264
      %p266 = scmp.ne.s32.totalorder %s254, %s255
      %p267 = scmp.eq.s32.totalorder %s35, 7
      %p268 = por %p266, %p267
      %p270 = scmp.ne.s32.totalorder %s255, %s269
      %p271 = scmp.eq.s32.totalorder %s35, 0
      %p272 = por %p270, %p271
      %s273 = ssub.s32 %s36, %s48
      %p274 = scmp.eq.s32.totalorder %s273, 0
      %s276 = sadd.s32 %s275, 1
      %s277 = scalar_select %p274, %s275, %s276
      %p280 = pneg %p274
      %p281 = scmp.eq.s32.totalorder %s29, 7
      %p282 = por %p280, %p281
      %p283 = scmp.ne.s32.totalorder %s275, %s278
      %p284 = scmp.eq.s32.totalorder %s29, 0
      %p285 = por %p283, %p284
      %p286 = scmp.ne.s32.totalorder %s275, %s278
      %p287 = scmp.eq.s32.totalorder %s34, 7
      %p288 = por %p286, %p287
      %p289 = scmp.ne.s32.totalorder %s278, %s279
      %p290 = scmp.eq.s32.totalorder %s34, 0
      %p291 = por %p289, %p290
      %p292 = scmp.ne.s32.totalorder %s278, %s279
      %p293 = scmp.eq.s32.totalorder %s35, 7
      %p294 = por %p292, %p293
      %p296 = scmp.ne.s32.totalorder %s279, %s295
      %p297 = scmp.eq.s32.totalorder %s35, 0
      %p298 = por %p296, %p297
      %p299 = scmp.le.s32.totalorder 1, %s29
      %p300 = scmp.lt.s32.totalorder %s29, 9
      %p301 = pnand %p299, %p300
      %p302 = pneg %p301
      // Predicated region
      $region9: #{tpu_custom_call.1} parent=5 // pred_check
        _
      $region10: #{tpu_custom_call.1} parent=5 // pred_check_branch
        %304 = sbr.rel (%p301) target = $region12
      $region11: #{tpu_custom_call.1} parent=5 // pred_region
        %s305 = ssub.s32 %s29, 1
        // Predicated region
        $region13: #{tpu_custom_call.1} parent=11 // pred_check
          %p306 = pneg %p202
        $region14: #{tpu_custom_call.1} parent=11 // pred_check_branch
          %308 = sbr.rel (%p306) target = $region16
        $region15: #{tpu_custom_call.1} parent=11 // pred_region
          _
        $region16: #{tpu_custom_call.1} parent=11 // pred_fallthru
          _
        // Predicated region
        $region17: #{tpu_custom_call.1} parent=11 // pred_check
          %p309 = pneg %p223
        $region18: #{tpu_custom_call.1} parent=11 // pred_check_branch
          %311 = sbr.rel (%p309) target = $region20
        $region19: #{tpu_custom_call.1} parent=11 // pred_region
          _
        $region20: #{tpu_custom_call.1} parent=11 // pred_fallthru
          _
        // Predicated region
        $region21: #{tpu_custom_call.1} parent=11 // pred_check
          %p312 = pneg %p244
        $region22: #{tpu_custom_call.1} parent=11 // pred_check_branch
          %314 = sbr.rel (%p312) target = $region24
        $region23: #{tpu_custom_call.1} parent=11 // pred_region
          _
        $region24: #{tpu_custom_call.1} parent=11 // pred_fallthru
          _
        // Predicated region
        $region25: #{tpu_custom_call.1} parent=11 // pred_check
          %p315 = pneg %p265
        $region26: #{tpu_custom_call.1} parent=11 // pred_check_branch
          %317 = sbr.rel (%p315) target = $region28
        $region27: #{tpu_custom_call.1} parent=11 // pred_region
          _
        $region28: #{tpu_custom_call.1} parent=11 // pred_fallthru
          _
      $region12: #{tpu_custom_call.1} parent=5 // pred_fallthru
        _
      %p318 = scmp.lt.s32.totalorder %s29, 8
      // Predicated region
      $region29: #{tpu_custom_call.1} parent=5 // pred_check
        %p319 = pneg %p318
      $region30: #{tpu_custom_call.1} parent=5 // pred_check_branch
        %321 = sbr.rel (%p319) target = $region32
      $region31: #{tpu_custom_call.1} parent=5 // pred_region
        // Predicated region
        $region33: #{tpu_custom_call.1} parent=31 // pred_check
          %p322 = pneg %p73
        $region34: #{tpu_custom_call.1} parent=31 // pred_check_branch
          %324 = sbr.rel (%p322) target = $region36
        $region35: #{tpu_custom_call.1} parent=31 // pred_region
          %s325 = sld [smem:[#allocation7 + %s36]]
          %s326 = sld [smem:[#allocation8 + %s36]]
          %s327 = ssub.s32 %s326, 1
          %p328 = scmp.lt.s32.totalorder %s37, %s327
          %s329 = scalar_select %p328, %s37, %s327
          %s330 = sadd.s32 %s325, %s329
          %s331 = smul.u32 16, %s330
          %p332 = scmp.lt.s32.totalorder %s331, 79
          %s333 = scalar_select %p332, %s331, 79
          %s334 = smul.addr %s333, 8
          %s335 = scalar_lea.vmem %s2, %s334
          %s336 = sld [smem:[#allocation7 + %s36]]
          %s337 = sld [smem:[#allocation8 + %s36]]
          %s338 = ssub.s32 %s337, 1
          %p339 = scmp.lt.s32.totalorder %s37, %s338
          %s340 = scalar_select %p339, %s37, %s338
          %s341 = sadd.s32 %s336, %s340
          %s342 = smul.u32 16, %s341
        $region36: #{tpu_custom_call.1} parent=31 // pred_fallthru
          _
        // Predicated region
        $region37: #{tpu_custom_call.1} parent=31 // pred_check
          %p343 = pneg %p111
        $region38: #{tpu_custom_call.1} parent=31 // pred_check_branch
          %345 = sbr.rel (%p343) target = $region40
        $region39: #{tpu_custom_call.1} parent=31 // pred_region
          %s346 = sld [smem:[#allocation7 + %s36]]
          %s347 = sld [smem:[#allocation8 + %s36]]
          %s348 = ssub.s32 %s347, 1
          %p349 = scmp.lt.s32.totalorder %s37, %s348
          %s350 = scalar_select %p349, %s37, %s348
          %s351 = sadd.s32 %s346, %s350
          %s352 = smul.u32 16, %s351
          %p353 = scmp.lt.s32.totalorder %s352, 79
          %s354 = scalar_select %p353, %s352, 79
          %s355 = smul.addr %s354, 8
          %s356 = scalar_lea.vmem %s3, %s355
          %s357 = sld [smem:[#allocation7 + %s36]]
          %s358 = sld [smem:[#allocation8 + %s36]]
          %s359 = ssub.s32 %s358, 1
          %p360 = scmp.lt.s32.totalorder %s37, %s359
          %s361 = scalar_select %p360, %s37, %s359
          %s362 = sadd.s32 %s357, %s361
          %s363 = smul.u32 16, %s362
        $region40: #{tpu_custom_call.1} parent=31 // pred_fallthru
          _
        // Predicated region
        $region41: #{tpu_custom_call.1} parent=31 // pred_check
          %p364 = pneg %p149
        $region42: #{tpu_custom_call.1} parent=31 // pred_check_branch
          %366 = sbr.rel (%p364) target = $region44
        $region43: #{tpu_custom_call.1} parent=31 // pred_region
          %s367 = sld [smem:[#allocation7 + %s36]]
          %s368 = sld [smem:[#allocation8 + %s36]]
          %s369 = ssub.s32 %s368, 1
          %p370 = scmp.lt.s32.totalorder %s37, %s369
          %s371 = scalar_select %p370, %s37, %s369
          %s372 = sadd.s32 %s367, %s371
          %s373 = smul.u32 16, %s372
          %p374 = scmp.lt.s32.totalorder %s373, 79
          %s375 = scalar_select %p374, %s373, 79
          %s376 = smul.addr %s375, 8
          %s377 = scalar_lea.vmem %s4, %s376
          %s378 = sld [smem:[#allocation7 + %s36]]
          %s379 = sld [smem:[#allocation8 + %s36]]
          %s380 = ssub.s32 %s379, 1
          %p381 = scmp.lt.s32.totalorder %s37, %s380
          %s382 = scalar_select %p381, %s37, %s380
          %s383 = sadd.s32 %s378, %s382
          %s384 = smul.u32 16, %s383
        $region44: #{tpu_custom_call.1} parent=31 // pred_fallthru
          _
        // Predicated region
        $region45: #{tpu_custom_call.1} parent=31 // pred_check
          %p385 = pneg %p175
        $region46: #{tpu_custom_call.1} parent=31 // pred_check_branch
          %387 = sbr.rel (%p385) target = $region48
        $region47: #{tpu_custom_call.1} parent=31 // pred_region
          %s388 = smul.u32 8, %s36
          %p389 = scmp.lt.s32.totalorder %s388, 15
          %s390 = scalar_select %p389, %s388, 15
          %s391 = smul.addr %s390, 8
          %s392 = scalar_lea.vmem %s5, %s391
          %s393 = smul.u32 8, %s36
        $region48: #{tpu_custom_call.1} parent=31 // pred_fallthru
          _
      $region32: #{tpu_custom_call.1} parent=5 // pred_fallthru
        _
      %p394 = scmp.le.s32.totalorder 1, %s29
      %p395 = scmp.lt.s32.totalorder %s29, 9
      %p396 = pnand %p394, %p395
      %p397 = pneg %p396
      // Predicated region
      $region49: #{tpu_custom_call.1} parent=5 // pred_check
        _
      $region50: #{tpu_custom_call.1} parent=5 // pred_check_branch
        %399 = sbr.rel (%p396) target = $region52
      $region51: #{tpu_custom_call.1} parent=5 // pred_region
        %s400 = ssub.s32 %s29, 1
        %s401 = sld [smem:[#allocation7 + %s38]]
        %s402 = sld [smem:[#allocation8 + %s38]]
        %s403 = ssub.s32 %s402, 1
        %p404 = scmp.lt.s32.totalorder %s39, %s403
        %s405 = scalar_select %p404, %s39, %s403
        %s406 = sadd.s32 %s401, %s405
        %s407 = smul.u32 16, %s406
        %p408 = scmp.lt.s32.totalorder %s407, 79
        %s409 = scalar_select %p408, %s407, 79
        %s410 = smul.addr %s409, 8
        %s411 = scalar_lea.vmem %s2, %s410
        %p412 = pneg %p79
        %p413 = pneg %p76
        %s414 = sld [smem:[#allocation7 + %s38]]
        %s415 = sld [smem:[#allocation8 + %s38]]
        %s416 = ssub.s32 %s415, 1
        %p417 = scmp.lt.s32.totalorder %s39, %s416
        %s418 = scalar_select %p417, %s39, %s416
        %s419 = sadd.s32 %s414, %s418
        %s420 = smul.u32 16, %s419
        %p421 = scmp.lt.s32.totalorder %s420, 79
        %s422 = scalar_select %p421, %s420, 79
        %s423 = smul.addr %s422, 8
        %s424 = scalar_lea.vmem %s3, %s423
        %p425 = pneg %p117
        %p426 = pneg %p114
        %s427 = sld [smem:[#allocation7 + %s38]]
        %s428 = sld [smem:[#allocation8 + %s38]]
        %s429 = ssub.s32 %s428, 1
        %p430 = scmp.lt.s32.totalorder %s39, %s429
        %s431 = scalar_select %p430, %s39, %s429
        %s432 = sadd.s32 %s427, %s431
        %s433 = smul.u32 16, %s432
        %p434 = scmp.lt.s32.totalorder %s433, 79
        %s435 = scalar_select %p434, %s433, 79
        %s436 = smul.addr %s435, 8
        %s437 = scalar_lea.vmem %s4, %s436
        %p438 = pneg %p155
        %p439 = pneg %p152
        %s440 = smul.u32 8, %s38
        %p441 = scmp.lt.s32.totalorder %s440, 15
        %s442 = scalar_select %p441, %s440, 15
        %s443 = smul.addr %s442, 8
        %s444 = scalar_lea.vmem %s5, %s443
        %p445 = pneg %p181
        %p446 = pneg %p178
        %p447 = pneg %p202
        %p448 = pneg %p199
        %p449 = pneg %p223
        %p450 = pneg %p220
        %p451 = pneg %p244
        %p452 = pneg %p241
        %p453 = pneg %p265
        %p454 = pneg %p262
        %p455 = pneg %p291
        %p456 = pneg %p288
        %s457 = sand.u32 %s278, 1
        %s458 = scalar_lea.sflag [#allocation10], %s457
        %s459 = sand.u32 %s278, 1
        %s460 = smul.addr %s459, 64
        %s461 = scalar_lea.vmem [#allocation9], %s460
        %s462 = sld [smem:[#allocation7 + %s38]]
        %s463 = sld [smem:[#allocation8 + %s38]]
        %s464 = ssub.s32 %s463, 1
        %p465 = scmp.lt.s32.totalorder %s39, %s464
        %s466 = scalar_select %p465, %s39, %s464
        %s467 = sadd.s32 %s462, %s466
        %s468 = smul.u32 16, %s467
        %p469 = scmp.lt.s32.totalorder %s468, 79
        %s470 = scalar_select %p469, %s468, 79
        %s471 = smul.addr %s470, 8
        %s472 = scalar_lea.vmem %s2, %s471
        %s473 = sld [smem:[#allocation7 + %s38]]
        %s474 = sld [smem:[#allocation8 + %s38]]
        %s475 = ssub.s32 %s474, 1
        %p476 = scmp.lt.s32.totalorder %s39, %s475
        %s477 = scalar_select %p476, %s39, %s475
        %s478 = sadd.s32 %s473, %s477
        %s479 = smul.u32 16, %s478
        %s480 = sld [smem:[#allocation7 + %s38]]
        %s481 = sld [smem:[#allocation8 + %s38]]
        %s482 = ssub.s32 %s481, 1
        %p483 = scmp.lt.s32.totalorder %s39, %s482
        %s484 = scalar_select %p483, %s39, %s482
        %s485 = sadd.s32 %s480, %s484
        %s486 = smul.u32 16, %s485
        %p487 = scmp.lt.s32.totalorder %s486, 79
        %s488 = scalar_select %p487, %s486, 79
        %s489 = smul.addr %s488, 8
        %s490 = scalar_lea.vmem %s3, %s489
        %s491 = sld [smem:[#allocation7 + %s38]]
        %s492 = sld [smem:[#allocation8 + %s38]]
        %s493 = ssub.s32 %s492, 1
        %p494 = scmp.lt.s32.totalorder %s39, %s493
        %s495 = scalar_select %p494, %s39, %s493
        %s496 = sadd.s32 %s491, %s495
        %s497 = smul.u32 16, %s496
        %s498 = sld [smem:[#allocation7 + %s38]]
        %s499 = sld [smem:[#allocation8 + %s38]]
        %s500 = ssub.s32 %s499, 1
        %p501 = scmp.lt.s32.totalorder %s39, %s500
        %s502 = scalar_select %p501, %s39, %s500
        %s503 = sadd.s32 %s498, %s502
        %s504 = smul.u32 16, %s503
        %p505 = scmp.lt.s32.totalorder %s504, 79
        %s506 = scalar_select %p505, %s504, 79
        %s507 = smul.addr %s506, 8
        %s508 = scalar_lea.vmem %s4, %s507
        %s509 = sld [smem:[#allocation7 + %s38]]
        %s510 = sld [smem:[#allocation8 + %s38]]
        %s511 = ssub.s32 %s510, 1
        %p512 = scmp.lt.s32.totalorder %s39, %s511
        %s513 = scalar_select %p512, %s39, %s511
        %s514 = sadd.s32 %s509, %s513
        %s515 = smul.u32 16, %s514
        %s516 = smul.u32 8, %s38
        %p517 = scmp.lt.s32.totalorder %s516, 15
        %s518 = scalar_select %p517, %s516, 15
        %s519 = smul.addr %s518, 8
        %s520 = scalar_lea.vmem %s5, %s519
        %s521 = smul.u32 8, %s38
        %s522 = smul.u32 8, %s38
        %p523 = scmp.eq.s32.totalorder %s39, 0
        // Predicated region
        $region53: #{tpu_custom_call.1} parent=51 // pred_check
          %p524 = pneg %p523
        $region54: #{tpu_custom_call.1} parent=51 // pred_check_branch
          %526 = sbr.rel (%p524) target = $region56
        $region55: #{tpu_custom_call.1} parent=51 // pred_region
          %v527 = vld [vmem:[%s520] sm:$0xff]
          %v528 = vld [vmem:[%s520 + $0x8] sm:$0xff]
          %v529 = vld [vmem:[%s520 + $0x10] sm:$0xff]
          %v530 = vld [vmem:[%s520 + $0x18] sm:$0xff]
          %v531 = vld [vmem:[%s520 + $0x20] sm:$0xff]
          %v532 = vld [vmem:[%s520 + $0x28] sm:$0xff]
          %v533 = vld [vmem:[%s520 + $0x30] sm:$0xff]
          %v534 = vld [vmem:[%s520 + $0x38] sm:$0xff]
          %v535 = vld [vmem:[%s8] sm:$0xff]
          %v536 = vld [vmem:[%s8 + $0x8] sm:$0xff]
          %vm537 = vcmask 130048
          %v539 = vsel %vm537, %v527, 0
          %v542 = vsel %vm537, %v528, 0
          %v545 = vsel %vm537, %v529, 0
          %v548 = vsel %vm537, %v530, 0
          %v551 = vsel %vm537, %v531, 0
          %v554 = vsel %vm537, %v532, 0
          %v557 = vsel %vm537, %v533, 0
          %v560 = vsel %vm537, %v534, 0
          %562 = vmatprep.subr.mxu0 0.0
          %563 = vmatpush1.msra.mxu0 0.0
          %564 = vmatprep.subr.mxu0 0.0
          %565 = vmatpush1.msra.mxu0 0.0
          %566 = vmatprep.subr.mxu0 0.0
          %567 = vmatpush1.msra.mxu0 0.0
          %568 = vmatprep.subr.mxu0 0.0
          %569 = vmatpush1.msra.mxu0 0.0
          %570 = vmatprep.subr.mxu0 0.0
          %571 = vmatpush1.msra.mxu0 0.0
          %572 = vmatprep.subr.mxu0 0.0
          %573 = vmatpush1.msra.mxu0 0.0
          %574 = vmatprep.subr.mxu0 0.0
          %575 = vmatpush1.msra.mxu0 0.0
          %576 = vmatprep.subr.mxu0 0.0
          %577 = vmatpush1.msra.mxu0 0.0
          %578 = vmatprep.subr.mxu0 0.0
          %579 = vmatpush1.msra.mxu0 0.0
          %580 = vmatprep.subr.mxu0 0.0
          %581 = vmatpush1.msra.mxu0 0.0
          %582 = vmatprep.subr.mxu0 0.0
          %583 = vmatpush1.msra.mxu0 0.0
          %584 = vmatprep.subr.mxu0 0.0
          %585 = vmatpush1.msra.mxu0 0.0
          %586 = vmatprep.subr.mxu0 0.0
          %587 = vmatpush1.msra.mxu0 0.0
          %588 = vmatprep.subr.mxu0 0.0
          %589 = vmatpush1.msra.mxu0 0.0
          %590 = vmatprep.subr.mxu0 0.0
          %591 = vmatpush1.msra.mxu0 %v536
          %592 = vmatprep.subr.mxu0 0.0
          %593 = vmatpush1.msra.mxu0 %v535
          %594 = vmatprep.subr.mxu0 0.0
          %595 = vmatpush2.msra.mxu0 0.0
          %596 = vmatprep.subr.mxu0 0.0
          %597 = vmatpush2.msra.mxu0 0.0
          %598 = vmatprep.subr.mxu0 0.0
          %599 = vmatpush2.msra.mxu0 0.0
          %600 = vmatprep.subr.mxu0 0.0
          %601 = vmatpush2.msra.mxu0 0.0
          %602 = vmatprep.subr.mxu0 0.0
          %603 = vmatpush2.msra.mxu0 0.0
          %604 = vmatprep.subr.mxu0 0.0
          %605 = vmatpush2.msra.mxu0 0.0
          %606 = vmatprep.subr.mxu0 0.0
          %607 = vmatpush2.msra.mxu0 0.0
          %608 = vmatprep.subr.mxu0 0.0
          %609 = vmatpush2.msra.mxu0 0.0
          %610 = vmatprep.subr.mxu0 0.0
          %611 = vmatpush2.msra.mxu0 0.0
          %612 = vmatprep.subr.mxu0 0.0
          %613 = vmatpush2.msra.mxu0 0.0
          %614 = vmatprep.subr.mxu0 0.0
          %615 = vmatpush2.msra.mxu0 0.0
          %616 = vmatprep.subr.mxu0 0.0
          %617 = vmatpush2.msra.mxu0 0.0
          %618 = vmatprep.subr.mxu0 0.0
          %619 = vmatpush2.msra.mxu0 0.0
          %620 = vmatprep.subr.mxu0 0.0
          %621 = vmatpush2.msra.mxu0 0.0
          %622 = vmatprep.subr.mxu0 0.0
          %623 = vmatpush2.msra.mxu0 0.0
          %624 = vmatprep.subr.mxu0 0.0
          %625 = vmatpush2.msra.mxu0 0.0
          %626 = vmatprep.mubr.f32.mxu0 0.0
          %627 = vmatmul.mubr.f32.gmra.mxu0 %v539
          %v628 = vpop.f32.mrf.mxu0
          %v629 = vadd.f32 0.0, %v628
          %v630 = vpop.f32.mrf.mxu0
          %631 = vmatprep.mubr.f32.mxu0 0.0
          %632 = vmatmul.mubr.f32.gmra.mxu0 %v542
          %v633 = vpop.f32.mrf.mxu0
          %v634 = vadd.f32 0.0, %v633
          %v635 = vpop.f32.mrf.mxu0
          %636 = vmatprep.mubr.f32.mxu0 0.0
          %637 = vmatmul.mubr.f32.gmra.mxu0 %v545
          %v638 = vpop.f32.mrf.mxu0
          %v639 = vadd.f32 0.0, %v638
          %v640 = vpop.f32.mrf.mxu0
          %641 = vmatprep.mubr.f32.mxu0 0.0
          %642 = vmatmul.mubr.f32.gmra.mxu0 %v548
          %v643 = vpop.f32.mrf.mxu0
          %v644 = vadd.f32 0.0, %v643
          %v645 = vpop.f32.mrf.mxu0
          %646 = vmatprep.mubr.f32.mxu0 0.0
          %647 = vmatmul.mubr.f32.gmra.mxu0 %v551
          %v648 = vpop.f32.mrf.mxu0
          %v649 = vadd.f32 0.0, %v648
          %v650 = vpop.f32.mrf.mxu0
          %651 = vmatprep.mubr.f32.mxu0 0.0
          %652 = vmatmul.mubr.f32.gmra.mxu0 %v554
          %v653 = vpop.f32.mrf.mxu0
          %v654 = vadd.f32 0.0, %v653
          %v655 = vpop.f32.mrf.mxu0
          %656 = vmatprep.mubr.f32.mxu0 0.0
          %657 = vmatmul.mubr.f32.gmra.mxu0 %v557
          %v658 = vpop.f32.mrf.mxu0
          %v659 = vadd.f32 0.0, %v658
          %v660 = vpop.f32.mrf.mxu0
          %661 = vmatprep.mubr.f32.mxu0 0.0
          %662 = vmatmul.mubr.f32.gmra.mxu0 %v560
          %v663 = vpop.f32.mrf.mxu0
          %v664 = vadd.f32 0.0, %v663
          %v665 = vpop.f32.mrf.mxu0
          %666 = vdwg.mxu0
          %667 = vst [vmem:[#allocation2] sm:$0xff] %v629
          %668 = vst [vmem:[#allocation2 + $0x8] sm:$0xff] %v634
          %669 = vst [vmem:[#allocation2 + $0x10] sm:$0xff] %v639
          %670 = vst [vmem:[#allocation2 + $0x18] sm:$0xff] %v644
          %671 = vst [vmem:[#allocation2 + $0x20] sm:$0xff] %v649
          %672 = vst [vmem:[#allocation2 + $0x28] sm:$0xff] %v654
          %673 = vst [vmem:[#allocation2 + $0x30] sm:$0xff] %v659
          %674 = vst [vmem:[#allocation2 + $0x38] sm:$0xff] %v664
          %675 = vst [vmem:[#allocation3] sm:$0x1] -1e+30
          %676 = vst [vmem:[#allocation4] sm:$0xff] 0.0
          %677 = vst [vmem:[#allocation4 + $0x8] sm:$0xff] 0.0
          %678 = vst [vmem:[#allocation4 + $0x10] sm:$0xff] 0.0
          %679 = vst [vmem:[#allocation4 + $0x18] sm:$0xff] 0.0
          %680 = vst [vmem:[#allocation4 + $0x20] sm:$0xff] 0.0
          %681 = vst [vmem:[#allocation4 + $0x28] sm:$0xff] 0.0
          %682 = vst [vmem:[#allocation4 + $0x30] sm:$0xff] 0.0
          %683 = vst [vmem:[#allocation4 + $0x38] sm:$0xff] 0.0
          %684 = vst [vmem:[#allocation5] sm:$0xff] 0.0
          %685 = vst [vmem:[#allocation5 + $0x8] sm:$0xff] 0.0
          %686 = vst [vmem:[#allocation5 + $0x10] sm:$0xff] 0.0
          %687 = vst [vmem:[#allocation5 + $0x18] sm:$0xff] 0.0
          %688 = vst [vmem:[#allocation5 + $0x20] sm:$0xff] 0.0
          %689 = vst [vmem:[#allocation5 + $0x28] sm:$0xff] 0.0
          %690 = vst [vmem:[#allocation5 + $0x30] sm:$0xff] 0.0
          %691 = vst [vmem:[#allocation5 + $0x38] sm:$0xff] 0.0
        $region56: #{tpu_custom_call.1} parent=51 // pred_fallthru
          _
        %s692 = sld [smem:[#allocation8 + %s38]]
        %p693 = scmp.lt.s32.totalorder %s39, %s692
        // Predicated region
        $region57: #{tpu_custom_call.1} parent=51 // pred_check
          %p694 = pneg %p693
        $region58: #{tpu_custom_call.1} parent=51 // pred_check_branch
          %696 = sbr.rel (%p694) target = $region60
        $region59: #{tpu_custom_call.1} parent=51 // pred_region
          %v697 = vld [vmem:[%s472] sm:$0xff]
          %v698 = vld [vmem:[%s472 + $0x8] sm:$0xff]
          %v699 = vld [vmem:[%s472 + $0x10] sm:$0xff]
          %v700 = vld [vmem:[%s472 + $0x18] sm:$0xff]
          %v701 = vld [vmem:[%s472 + $0x20] sm:$0xff]
          %v702 = vld [vmem:[%s472 + $0x28] sm:$0xff]
          %v703 = vld [vmem:[%s472 + $0x30] sm:$0xff]
          %v704 = vld [vmem:[%s472 + $0x38] sm:$0xff]
          %v705 = vld [vmem:[%s472 + $0x40] sm:$0xff]
          %v706 = vld [vmem:[%s472 + $0x48] sm:$0xff]
          %v707 = vld [vmem:[%s472 + $0x50] sm:$0xff]
          %v708 = vld [vmem:[%s472 + $0x58] sm:$0xff]
          %v709 = vld [vmem:[%s472 + $0x60] sm:$0xff]
          %v710 = vld [vmem:[%s472 + $0x68] sm:$0xff]
          %v711 = vld [vmem:[%s472 + $0x70] sm:$0xff]
          %v712 = vld [vmem:[%s472 + $0x78] sm:$0xff]
          %v713 = vld [vmem:[%s490] sm:$0xff]
          %v714 = vld [vmem:[%s490 + $0x8] sm:$0xff]
          %v715 = vld [vmem:[%s490 + $0x10] sm:$0xff]
          %v716 = vld [vmem:[%s490 + $0x18] sm:$0xff]
          %v717 = vld [vmem:[%s490 + $0x20] sm:$0xff]
          %v718 = vld [vmem:[%s490 + $0x28] sm:$0xff]
          %v719 = vld [vmem:[%s490 + $0x30] sm:$0xff]
          %v720 = vld [vmem:[%s490 + $0x38] sm:$0xff]
          %v721 = vld [vmem:[%s490 + $0x40] sm:$0xff]
          %v722 = vld [vmem:[%s490 + $0x48] sm:$0xff]
          %v723 = vld [vmem:[%s490 + $0x50] sm:$0xff]
          %v724 = vld [vmem:[%s490 + $0x58] sm:$0xff]
          %v725 = vld [vmem:[%s490 + $0x60] sm:$0xff]
          %v726 = vld [vmem:[%s490 + $0x68] sm:$0xff]
          %v727 = vld [vmem:[%s490 + $0x70] sm:$0xff]
          %v728 = vld [vmem:[%s490 + $0x78] sm:$0xff]
          %v729 = vld [vmem:[%s6] sm:$0xff]
          %v730 = vld [vmem:[%s6 + $0x8] sm:$0xff]
          %v731 = vld [vmem:[%s7] sm:$0xff]
          %v732 = vld [vmem:[%s7 + $0x8] sm:$0xff]
          %vm733 = vcmask 130048
          %v735 = vsel %vm733, %v713, 0
          %v738 = vsel %vm733, %v714, 0
          %v741 = vsel %vm733, %v715, 0
          %v744 = vsel %vm733, %v716, 0
          %v747 = vsel %vm733, %v717, 0
          %v750 = vsel %vm733, %v718, 0
          %v753 = vsel %vm733, %v719, 0
          %v756 = vsel %vm733, %v720, 0
          %v759 = vsel %vm733, %v721, 0
          %v762 = vsel %vm733, %v722, 0
          %v765 = vsel %vm733, %v723, 0
          %v768 = vsel %vm733, %v724, 0
          %v771 = vsel %vm733, %v725, 0
          %v774 = vsel %vm733, %v726, 0
          %v777 = vsel %vm733, %v727, 0
          %v780 = vsel %vm733, %v728, 0
          %782 = vmatprep.subr.mxu0 0.0
          %783 = vmatpush1.msra.mxu0 0.0
          %784 = vmatprep.subr.mxu0 0.0
          %785 = vmatpush1.msra.mxu0 0.0
          %786 = vmatprep.subr.mxu0 0.0
          %787 = vmatpush1.msra.mxu0 0.0
          %788 = vmatprep.subr.mxu0 0.0
          %789 = vmatpush1.msra.mxu0 0.0
          %790 = vmatprep.subr.mxu0 0.0
          %791 = vmatpush1.msra.mxu0 0.0
          %792 = vmatprep.subr.mxu0 0.0
          %793 = vmatpush1.msra.mxu0 0.0
          %794 = vmatprep.subr.mxu0 0.0
          %795 = vmatpush1.msra.mxu0 0.0
          %796 = vmatprep.subr.mxu0 0.0
          %797 = vmatpush1.msra.mxu0 0.0
          %798 = vmatprep.subr.mxu0 0.0
          %799 = vmatpush1.msra.mxu0 0.0
          %800 = vmatprep.subr.mxu0 0.0
          %801 = vmatpush1.msra.mxu0 0.0
          %802 = vmatprep.subr.mxu0 0.0
          %803 = vmatpush1.msra.mxu0 0.0
          %804 = vmatprep.subr.mxu0 0.0
          %805 = vmatpush1.msra.mxu0 0.0
          %806 = vmatprep.subr.mxu0 0.0
          %807 = vmatpush1.msra.mxu0 0.0
          %808 = vmatprep.subr.mxu0 0.0
          %809 = vmatpush1.msra.mxu0 0.0
          %810 = vmatprep.subr.mxu0 0.0
          %811 = vmatpush1.msra.mxu0 %v732
          %812 = vmatprep.subr.mxu0 0.0
          %813 = vmatpush1.msra.mxu0 %v731
          %814 = vmatprep.subr.mxu0 0.0
          %815 = vmatpush2.msra.mxu0 0.0
          %816 = vmatprep.subr.mxu0 0.0
          %817 = vmatpush2.msra.mxu0 0.0
          %818 = vmatprep.subr.mxu0 0.0
          %819 = vmatpush2.msra.mxu0 0.0
          %820 = vmatprep.subr.mxu0 0.0
          %821 = vmatpush2.msra.mxu0 0.0
          %822 = vmatprep.subr.mxu0 0.0
          %823 = vmatpush2.msra.mxu0 0.0
          %824 = vmatprep.subr.mxu0 0.0
          %825 = vmatpush2.msra.mxu0 0.0
          %826 = vmatprep.subr.mxu0 0.0
          %827 = vmatpush2.msra.mxu0 0.0
          %828 = vmatprep.subr.mxu0 0.0
          %829 = vmatpush2.msra.mxu0 0.0
          %830 = vmatprep.subr.mxu0 0.0
          %831 = vmatpush2.msra.mxu0 0.0
          %832 = vmatprep.subr.mxu0 0.0
          %833 = vmatpush2.msra.mxu0 0.0
          %834 = vmatprep.subr.mxu0 0.0
          %835 = vmatpush2.msra.mxu0 0.0
          %836 = vmatprep.subr.mxu0 0.0
          %837 = vmatpush2.msra.mxu0 0.0
          %838 = vmatprep.subr.mxu0 0.0
          %839 = vmatpush2.msra.mxu0 0.0
          %840 = vmatprep.subr.mxu0 0.0
          %841 = vmatpush2.msra.mxu0 0.0
          %842 = vmatprep.subr.mxu0 0.0
          %843 = vmatpush2.msra.mxu0 0.0
          %844 = vmatprep.subr.mxu0 0.0
          %845 = vmatpush2.msra.mxu0 0.0
          %846 = vmatprep.mubr.f32.mxu0 0.0
          %847 = vmatmul.mubr.f32.gmra.mxu0 %v735
          %v848 = vpop.f32.mrf.mxu0
          %v849 = vadd.f32 0.0, %v848
          %v850 = vpop.f32.mrf.mxu0
          %851 = vmatprep.mubr.f32.mxu0 0.0
          %852 = vmatmul.mubr.f32.gmra.mxu0 %v738
          %v853 = vpop.f32.mrf.mxu0
          %v854 = vadd.f32 0.0, %v853
          %v855 = vpop.f32.mrf.mxu0
          %856 = vmatprep.mubr.f32.mxu0 0.0
          %857 = vmatmul.mubr.f32.gmra.mxu0 %v741
          %v858 = vpop.f32.mrf.mxu0
          %v859 = vadd.f32 0.0, %v858
          %v860 = vpop.f32.mrf.mxu0
          %861 = vmatprep.mubr.f32.mxu0 0.0
          %862 = vmatmul.mubr.f32.gmra.mxu0 %v744
          %v863 = vpop.f32.mrf.mxu0
          %v864 = vadd.f32 0.0, %v863
          %v865 = vpop.f32.mrf.mxu0
          %866 = vmatprep.mubr.f32.mxu0 0.0
          %867 = vmatmul.mubr.f32.gmra.mxu0 %v747
          %v868 = vpop.f32.mrf.mxu0
          %v869 = vadd.f32 0.0, %v868
          %v870 = vpop.f32.mrf.mxu0
          %871 = vmatprep.mubr.f32.mxu0 0.0
          %872 = vmatmul.mubr.f32.gmra.mxu0 %v750
          %v873 = vpop.f32.mrf.mxu0
          %v874 = vadd.f32 0.0, %v873
          %v875 = vpop.f32.mrf.mxu0
          %876 = vmatprep.mubr.f32.mxu0 0.0
          %877 = vmatmul.mubr.f32.gmra.mxu0 %v753
          %v878 = vpop.f32.mrf.mxu0
          %v879 = vadd.f32 0.0, %v878
          %v880 = vpop.f32.mrf.mxu0
          %881 = vmatprep.mubr.f32.mxu0 0.0
          %882 = vmatmul.mubr.f32.gmra.mxu0 %v756
          %v883 = vpop.f32.mrf.mxu0
          %v884 = vadd.f32 0.0, %v883
          %v885 = vpop.f32.mrf.mxu0
          %886 = vmatprep.mubr.f32.mxu0 0.0
          %887 = vmatmul.mubr.f32.gmra.mxu0 %v759
          %v888 = vpop.f32.mrf.mxu0
          %v889 = vadd.f32 0.0, %v888
          %v890 = vpop.f32.mrf.mxu0
          %891 = vmatprep.mubr.f32.mxu0 0.0
          %892 = vmatmul.mubr.f32.gmra.mxu0 %v762
          %v893 = vpop.f32.mrf.mxu0
          %v894 = vadd.f32 0.0, %v893
          %v895 = vpop.f32.mrf.mxu0
          %896 = vmatprep.mubr.f32.mxu0 0.0
          %897 = vmatmul.mubr.f32.gmra.mxu0 %v765
          %v898 = vpop.f32.mrf.mxu0
          %v899 = vadd.f32 0.0, %v898
          %v900 = vpop.f32.mrf.mxu0
          %901 = vmatprep.mubr.f32.mxu0 0.0
          %902 = vmatmul.mubr.f32.gmra.mxu0 %v768
          %v903 = vpop.f32.mrf.mxu0
          %v904 = vadd.f32 0.0, %v903
          %v905 = vpop.f32.mrf.mxu0
          %906 = vmatprep.mubr.f32.mxu0 0.0
          %907 = vmatmul.mubr.f32.gmra.mxu0 %v771
          %v908 = vpop.f32.mrf.mxu0
          %v909 = vadd.f32 0.0, %v908
          %v910 = vpop.f32.mrf.mxu0
          %911 = vmatprep.mubr.f32.mxu0 0.0
          %912 = vmatmul.mubr.f32.gmra.mxu0 %v774
          %v913 = vpop.f32.mrf.mxu0
          %v914 = vadd.f32 0.0, %v913
          %v915 = vpop.f32.mrf.mxu0
          %916 = vmatprep.mubr.f32.mxu0 0.0
          %917 = vmatmul.mubr.f32.gmra.mxu0 %v777
          %v918 = vpop.f32.mrf.mxu0
          %v919 = vadd.f32 0.0, %v918
          %v920 = vpop.f32.mrf.mxu0
          %921 = vmatprep.mubr.f32.mxu0 0.0
          %922 = vmatmul.mubr.f32.gmra.mxu0 %v780
          %v923 = vpop.f32.mrf.mxu0
          %v924 = vadd.f32 0.0, %v923
          %v925 = vpop.f32.mrf.mxu0
          %926 = vdwg.mxu0
          %v928 = vsel %vm733, %v697, 0
          %v931 = vsel %vm733, %v698, 0
          %v934 = vsel %vm733, %v699, 0
          %v937 = vsel %vm733, %v700, 0
          %v940 = vsel %vm733, %v701, 0
          %v943 = vsel %vm733, %v702, 0
          %v946 = vsel %vm733, %v703, 0
          %v949 = vsel %vm733, %v704, 0
          %v952 = vsel %vm733, %v705, 0
          %v955 = vsel %vm733, %v706, 0
          %v958 = vsel %vm733, %v707, 0
          %v961 = vsel %vm733, %v708, 0
          %v964 = vsel %vm733, %v709, 0
          %v967 = vsel %vm733, %v710, 0
          %v970 = vsel %vm733, %v711, 0
          %v973 = vsel %vm733, %v712, 0
          %975 = vmatprep.subr.mxu0 0.0
          %976 = vmatpush1.msra.mxu0 0.0
          %977 = vmatprep.subr.mxu0 0.0
          %978 = vmatpush1.msra.mxu0 0.0
          %979 = vmatprep.subr.mxu0 0.0
          %980 = vmatpush1.msra.mxu0 0.0
          %981 = vmatprep.subr.mxu0 0.0
          %982 = vmatpush1.msra.mxu0 0.0
          %983 = vmatprep.subr.mxu0 0.0
          %984 = vmatpush1.msra.mxu0 0.0
          %985 = vmatprep.subr.mxu0 0.0
          %986 = vmatpush1.msra.mxu0 0.0
          %987 = vmatprep.subr.mxu0 0.0
          %988 = vmatpush1.msra.mxu0 0.0
          %989 = vmatprep.subr.mxu0 0.0
          %990 = vmatpush1.msra.mxu0 0.0
          %991 = vmatprep.subr.mxu0 0.0
          %992 = vmatpush1.msra.mxu0 0.0
          %993 = vmatprep.subr.mxu0 0.0
          %994 = vmatpush1.msra.mxu0 0.0
          %995 = vmatprep.subr.mxu0 0.0
          %996 = vmatpush1.msra.mxu0 0.0
          %997 = vmatprep.subr.mxu0 0.0
          %998 = vmatpush1.msra.mxu0 0.0
          %999 = vmatprep.subr.mxu0 0.0
          %1000 = vmatpush1.msra.mxu0 0.0
          %1001 = vmatprep.subr.mxu0 0.0
          %1002 = vmatpush1.msra.mxu0 0.0
          %1003 = vmatprep.subr.mxu0 0.0
          %1004 = vmatpush1.msra.mxu0 %v730
          %1005 = vmatprep.subr.mxu0 0.0
          %1006 = vmatpush1.msra.mxu0 %v729
          %1007 = vmatprep.subr.mxu0 0.0
          %1008 = vmatpush2.msra.mxu0 0.0
          %1009 = vmatprep.subr.mxu0 0.0
          %1010 = vmatpush2.msra.mxu0 0.0
          %1011 = vmatprep.subr.mxu0 0.0
          %1012 = vmatpush2.msra.mxu0 0.0
          %1013 = vmatprep.subr.mxu0 0.0
          %1014 = vmatpush2.msra.mxu0 0.0
          %1015 = vmatprep.subr.mxu0 0.0
          %1016 = vmatpush2.msra.mxu0 0.0
          %1017 = vmatprep.subr.mxu0 0.0
          %1018 = vmatpush2.msra.mxu0 0.0
          %1019 = vmatprep.subr.mxu0 0.0
          %1020 = vmatpush2.msra.mxu0 0.0
          %1021 = vmatprep.subr.mxu0 0.0
          %1022 = vmatpush2.msra.mxu0 0.0
          %1023 = vmatprep.subr.mxu0 0.0
          %1024 = vmatpush2.msra.mxu0 0.0
          %1025 = vmatprep.subr.mxu0 0.0
          %1026 = vmatpush2.msra.mxu0 0.0
          %1027 = vmatprep.subr.mxu0 0.0
          %1028 = vmatpush2.msra.mxu0 0.0
          %1029 = vmatprep.subr.mxu0 0.0
          %1030 = vmatpush2.msra.mxu0 0.0
          %1031 = vmatprep.subr.mxu0 0.0
          %1032 = vmatpush2.msra.mxu0 0.0
          %1033 = vmatprep.subr.mxu0 0.0
          %1034 = vmatpush2.msra.mxu0 0.0
          %1035 = vmatprep.subr.mxu0 0.0
          %1036 = vmatpush2.msra.mxu0 0.0
          %1037 = vmatprep.subr.mxu0 0.0
          %1038 = vmatpush2.msra.mxu0 0.0
          %1039 = vmatprep.mubr.f32.mxu0 0.0
          %1040 = vmatmul.mubr.f32.gmra.mxu0 %v928
          %v1041 = vpop.f32.mrf.mxu0
          %v1042 = vadd.f32 %v849, %v1041
          %v1043 = vpop.f32.mrf.mxu0
          %1044 = vmatprep.mubr.f32.mxu0 0.0
          %1045 = vmatmul.mubr.f32.gmra.mxu0 %v931
          %v1046 = vpop.f32.mrf.mxu0
          %v1047 = vadd.f32 %v854, %v1046
          %v1048 = vpop.f32.mrf.mxu0
          %1049 = vmatprep.mubr.f32.mxu0 0.0
          %1050 = vmatmul.mubr.f32.gmra.mxu0 %v934
          %v1051 = vpop.f32.mrf.mxu0
          %v1052 = vadd.f32 %v859, %v1051
          %v1053 = vpop.f32.mrf.mxu0
          %1054 = vmatprep.mubr.f32.mxu0 0.0
          %1055 = vmatmul.mubr.f32.gmra.mxu0 %v937
          %v1056 = vpop.f32.mrf.mxu0
          %v1057 = vadd.f32 %v864, %v1056
          %v1058 = vpop.f32.mrf.mxu0
          %1059 = vmatprep.mubr.f32.mxu0 0.0
          %1060 = vmatmul.mubr.f32.gmra.mxu0 %v940
          %v1061 = vpop.f32.mrf.mxu0
          %v1062 = vadd.f32 %v869, %v1061
          %v1063 = vpop.f32.mrf.mxu0
          %1064 = vmatprep.mubr.f32.mxu0 0.0
          %1065 = vmatmul.mubr.f32.gmra.mxu0 %v943
          %v1066 = vpop.f32.mrf.mxu0
          %v1067 = vadd.f32 %v874, %v1066
          %v1068 = vpop.f32.mrf.mxu0
          %1069 = vmatprep.mubr.f32.mxu0 0.0
          %1070 = vmatmul.mubr.f32.gmra.mxu0 %v946
          %v1071 = vpop.f32.mrf.mxu0
          %v1072 = vadd.f32 %v879, %v1071
          %v1073 = vpop.f32.mrf.mxu0
          %1074 = vmatprep.mubr.f32.mxu0 0.0
          %1075 = vmatmul.mubr.f32.gmra.mxu0 %v949
          %v1076 = vpop.f32.mrf.mxu0
          %v1077 = vadd.f32 %v884, %v1076
          %v1078 = vpop.f32.mrf.mxu0
          %1079 = vmatprep.mubr.f32.mxu0 0.0
          %1080 = vmatmul.mubr.f32.gmra.mxu0 %v952
          %v1081 = vpop.f32.mrf.mxu0
          %v1082 = vadd.f32 %v889, %v1081
          %v1083 = vpop.f32.mrf.mxu0
          %1084 = vmatprep.mubr.f32.mxu0 0.0
          %1085 = vmatmul.mubr.f32.gmra.mxu0 %v955
          %v1086 = vpop.f32.mrf.mxu0
          %v1087 = vadd.f32 %v894, %v1086
          %v1088 = vpop.f32.mrf.mxu0
          %1089 = vmatprep.mubr.f32.mxu0 0.0
          %1090 = vmatmul.mubr.f32.gmra.mxu0 %v958
          %v1091 = vpop.f32.mrf.mxu0
          %v1092 = vadd.f32 %v899, %v1091
          %v1093 = vpop.f32.mrf.mxu0
          %1094 = vmatprep.mubr.f32.mxu0 0.0
          %1095 = vmatmul.mubr.f32.gmra.mxu0 %v961
          %v1096 = vpop.f32.mrf.mxu0
          %v1097 = vadd.f32 %v904, %v1096
          %v1098 = vpop.f32.mrf.mxu0
          %1099 = vmatprep.mubr.f32.mxu0 0.0
          %1100 = vmatmul.mubr.f32.gmra.mxu0 %v964
          %v1101 = vpop.f32.mrf.mxu0
          %v1102 = vadd.f32 %v909, %v1101
          %v1103 = vpop.f32.mrf.mxu0
          %1104 = vmatprep.mubr.f32.mxu0 0.0
          %1105 = vmatmul.mubr.f32.gmra.mxu0 %v967
          %v1106 = vpop.f32.mrf.mxu0
          %v1107 = vadd.f32 %v914, %v1106
          %v1108 = vpop.f32.mrf.mxu0
          %1109 = vmatprep.mubr.f32.mxu0 0.0
          %1110 = vmatmul.mubr.f32.gmra.mxu0 %v970
          %v1111 = vpop.f32.mrf.mxu0
          %v1112 = vadd.f32 %v919, %v1111
          %v1113 = vpop.f32.mrf.mxu0
          %1114 = vmatprep.mubr.f32.mxu0 0.0
          %1115 = vmatmul.mubr.f32.gmra.mxu0 %v973
          %v1116 = vpop.f32.mrf.mxu0
          %v1117 = vadd.f32 %v924, %v1116
          %v1118 = vpop.f32.mrf.mxu0
          %1119 = vdwg.mxu0
          %v1120 = vld [vmem:[%s508] sm:$0xff]
          %v1121 = vld [vmem:[%s508 + $0x8] sm:$0xff]
          %v1122 = vld [vmem:[%s508 + $0x10] sm:$0xff]
          %v1123 = vld [vmem:[%s508 + $0x18] sm:$0xff]
          %v1124 = vld [vmem:[%s508 + $0x20] sm:$0xff]
          %v1125 = vld [vmem:[%s508 + $0x28] sm:$0xff]
          %v1126 = vld [vmem:[%s508 + $0x30] sm:$0xff]
          %v1127 = vld [vmem:[%s508 + $0x38] sm:$0xff]
          %v1128 = vld [vmem:[%s508 + $0x40] sm:$0xff]
          %v1129 = vld [vmem:[%s508 + $0x48] sm:$0xff]
          %v1130 = vld [vmem:[%s508 + $0x50] sm:$0xff]
          %v1131 = vld [vmem:[%s508 + $0x58] sm:$0xff]
          %v1132 = vld [vmem:[%s508 + $0x60] sm:$0xff]
          %v1133 = vld [vmem:[%s508 + $0x68] sm:$0xff]
          %v1134 = vld [vmem:[%s508 + $0x70] sm:$0xff]
          %v1135 = vld [vmem:[%s508 + $0x78] sm:$0xff]
          %v1136 = vlaneseq
          %v1137 = vand.u32 %v1136, 127
          %s1138 = smul.u32 %s38, 64
          %v1139 = vstv %s1138
          %v1140 = vadd.s32 %v1137, %v1139
          %1141 = vset.pattern.permute.xlu0 0
          %1142 = vperm.xlu0 %1141, %v1120
          %v1143 = vpop.permute.xlu0 %1142
          %1144 = vset.pattern.permute.xlu0 0
          %1145 = vperm.xlu0 %1144, %v1121
          %v1146 = vpop.permute.xlu0 %1145
          %1147 = vset.pattern.permute.xlu0 0
          %1148 = vperm.xlu0 %1147, %v1122
          %v1149 = vpop.permute.xlu0 %1148
          %1150 = vset.pattern.permute.xlu0 0
          %1151 = vperm.xlu0 %1150, %v1123
          %v1152 = vpop.permute.xlu0 %1151
          %1153 = vset.pattern.permute.xlu0 0
          %1154 = vperm.xlu0 %1153, %v1124
          %v1155 = vpop.permute.xlu0 %1154
          %1156 = vset.pattern.permute.xlu0 0
          %1157 = vperm.xlu0 %1156, %v1125
          %v1158 = vpop.permute.xlu0 %1157
          %1159 = vset.pattern.permute.xlu0 0
          %1160 = vperm.xlu0 %1159, %v1126
          %v1161 = vpop.permute.xlu0 %1160
          %1162 = vset.pattern.permute.xlu0 0
          %1163 = vperm.xlu0 %1162, %v1127
          %v1164 = vpop.permute.xlu0 %1163
          %1165 = vset.pattern.permute.xlu0 0
          %1166 = vperm.xlu0 %1165, %v1128
          %v1167 = vpop.permute.xlu0 %1166
          %1168 = vset.pattern.permute.xlu0 0
          %1169 = vperm.xlu0 %1168, %v1129
          %v1170 = vpop.permute.xlu0 %1169
          %1171 = vset.pattern.permute.xlu0 0
          %1172 = vperm.xlu0 %1171, %v1130
          %v1173 = vpop.permute.xlu0 %1172
          %1174 = vset.pattern.permute.xlu0 0
          %1175 = vperm.xlu0 %1174, %v1131
          %v1176 = vpop.permute.xlu0 %1175
          %1177 = vset.pattern.permute.xlu0 0
          %1178 = vperm.xlu0 %1177, %v1132
          %v1179 = vpop.permute.xlu0 %1178
          %1180 = vset.pattern.permute.xlu0 0
          %1181 = vperm.xlu0 %1180, %v1133
          %v1182 = vpop.permute.xlu0 %1181
          %1183 = vset.pattern.permute.xlu0 0
          %1184 = vperm.xlu0 %1183, %v1134
          %v1185 = vpop.permute.xlu0 %1184
          %1186 = vset.pattern.permute.xlu0 0
          %1187 = vperm.xlu0 %1186, %v1135
          %v1188 = vpop.permute.xlu0 %1187
          %vm1189 = vcmp.eq.s32.totalorder %v1143, %v1140
          %vm1190 = vcmp.eq.s32.totalorder %v1146, %v1140
          %vm1191 = vcmp.eq.s32.totalorder %v1149, %v1140
          %vm1192 = vcmp.eq.s32.totalorder %v1152, %v1140
          %vm1193 = vcmp.eq.s32.totalorder %v1155, %v1140
          %vm1194 = vcmp.eq.s32.totalorder %v1158, %v1140
          %vm1195 = vcmp.eq.s32.totalorder %v1161, %v1140
          %vm1196 = vcmp.eq.s32.totalorder %v1164, %v1140
          %vm1197 = vcmp.eq.s32.totalorder %v1167, %v1140
          %vm1198 = vcmp.eq.s32.totalorder %v1170, %v1140
          %vm1199 = vcmp.eq.s32.totalorder %v1173, %v1140
          %vm1200 = vcmp.eq.s32.totalorder %v1176, %v1140
          %vm1201 = vcmp.eq.s32.totalorder %v1179, %v1140
          %vm1202 = vcmp.eq.s32.totalorder %v1182, %v1140
          %vm1203 = vcmp.eq.s32.totalorder %v1185, %v1140
          %vm1204 = vcmp.eq.s32.totalorder %v1188, %v1140
          %v1205 = vsel %vm1189, 1, 0
          %v1206 = vsel %vm1190, 1, 0
          %v1207 = vsel %vm1191, 1, 0
          %v1208 = vsel %vm1192, 1, 0
          %v1209 = vsel %vm1193, 1, 0
          %v1210 = vsel %vm1194, 1, 0
          %v1211 = vsel %vm1195, 1, 0
          %v1212 = vsel %vm1196, 1, 0
          %v1213 = vsel %vm1197, 1, 0
          %v1214 = vsel %vm1198, 1, 0
          %v1215 = vsel %vm1199, 1, 0
          %v1216 = vsel %vm1200, 1, 0
          %v1217 = vsel %vm1201, 1, 0
          %v1218 = vsel %vm1202, 1, 0
          %v1219 = vsel %vm1203, 1, 0
          %v1220 = vsel %vm1204, 1, 0
          %v1221 = vcvt.s32.f32 %v1205
          %v1222 = vcvt.s32.f32 %v1206
          %v1223 = vcvt.s32.f32 %v1207
          %v1224 = vcvt.s32.f32 %v1208
          %v1225 = vcvt.s32.f32 %v1209
          %v1226 = vcvt.s32.f32 %v1210
          %v1227 = vcvt.s32.f32 %v1211
          %v1228 = vcvt.s32.f32 %v1212
          %v1229 = vcvt.s32.f32 %v1213
          %v1230 = vcvt.s32.f32 %v1214
          %v1231 = vcvt.s32.f32 %v1215
          %v1232 = vcvt.s32.f32 %v1216
          %v1233 = vcvt.s32.f32 %v1217
          %v1234 = vcvt.s32.f32 %v1218
          %v1235 = vcvt.s32.f32 %v1219
          %v1236 = vcvt.s32.f32 %v1220
          %v1237 = vld [vmem:[#allocation2] sm:$0xff]
          %v1238 = vld [vmem:[#allocation2 + $0x8] sm:$0xff]
          %v1239 = vld [vmem:[#allocation2 + $0x10] sm:$0xff]
          %v1240 = vld [vmem:[#allocation2 + $0x18] sm:$0xff]
          %v1241 = vld [vmem:[#allocation2 + $0x20] sm:$0xff]
          %v1242 = vld [vmem:[#allocation2 + $0x28] sm:$0xff]
          %v1243 = vld [vmem:[#allocation2 + $0x30] sm:$0xff]
          %v1244 = vld [vmem:[#allocation2 + $0x38] sm:$0xff]
          %vm1245 = vcmask 523264
          %v1247 = vsel %vm1245, %v1221, 0
          %v1250 = vsel %vm1245, %v1222, 0
          %v1253 = vsel %vm1245, %v1223, 0
          %v1256 = vsel %vm1245, %v1224, 0
          %v1259 = vsel %vm1245, %v1225, 0
          %v1262 = vsel %vm1245, %v1226, 0
          %v1265 = vsel %vm1245, %v1227, 0
          %v1268 = vsel %vm1245, %v1228, 0
          %v1271 = vsel %vm1245, %v1229, 0
          %v1274 = vsel %vm1245, %v1230, 0
          %v1277 = vsel %vm1245, %v1231, 0
          %v1280 = vsel %vm1245, %v1232, 0
          %v1283 = vsel %vm1245, %v1233, 0
          %v1286 = vsel %vm1245, %v1234, 0
          %v1289 = vsel %vm1245, %v1235, 0
          %v1292 = vsel %vm1245, %v1236, 0
          %1294 = vmatprep.subr.mxu0 0.0
          %1295 = vmatpush1.msra.mxu0 0.0
          %1296 = vmatprep.subr.mxu0 0.0
          %1297 = vmatpush1.msra.mxu0 0.0
          %1298 = vmatprep.subr.mxu0 0.0
          %1299 = vmatpush1.msra.mxu0 0.0
          %1300 = vmatprep.subr.mxu0 0.0
          %1301 = vmatpush1.msra.mxu0 0.0
          %1302 = vmatprep.subr.mxu0 0.0
          %1303 = vmatpush1.msra.mxu0 0.0
          %1304 = vmatprep.subr.mxu0 0.0
          %1305 = vmatpush1.msra.mxu0 0.0
          %1306 = vmatprep.subr.mxu0 0.0
          %1307 = vmatpush1.msra.mxu0 0.0
          %1308 = vmatprep.subr.mxu0 0.0
          %1309 = vmatpush1.msra.mxu0 0.0
          %1310 = vmatprep.subr.mxu0 0.0
          %1311 = vmatpush1.msra.mxu0 %v1244
          %1312 = vmatprep.subr.mxu0 0.0
          %1313 = vmatpush1.msra.mxu0 %v1243
          %1314 = vmatprep.subr.mxu0 0.0
          %1315 = vmatpush1.msra.mxu0 %v1242
          %1316 = vmatprep.subr.mxu0 0.0
          %1317 = vmatpush1.msra.mxu0 %v1241
          %1318 = vmatprep.subr.mxu0 0.0
          %1319 = vmatpush1.msra.mxu0 %v1240
          %1320 = vmatprep.subr.mxu0 0.0
          %1321 = vmatpush1.msra.mxu0 %v1239
          %1322 = vmatprep.subr.mxu0 0.0
          %1323 = vmatpush1.msra.mxu0 %v1238
          %1324 = vmatprep.subr.mxu0 0.0
          %1325 = vmatpush1.msra.mxu0 %v1237
          %1326 = vmatprep.subr.mxu0 0.0
          %1327 = vmatpush2.msra.mxu0 0.0
          %1328 = vmatprep.subr.mxu0 0.0
          %1329 = vmatpush2.msra.mxu0 0.0
          %1330 = vmatprep.subr.mxu0 0.0
          %1331 = vmatpush2.msra.mxu0 0.0
          %1332 = vmatprep.subr.mxu0 0.0
          %1333 = vmatpush2.msra.mxu0 0.0
          %1334 = vmatprep.subr.mxu0 0.0
          %1335 = vmatpush2.msra.mxu0 0.0
          %1336 = vmatprep.subr.mxu0 0.0
          %1337 = vmatpush2.msra.mxu0 0.0
          %1338 = vmatprep.subr.mxu0 0.0
          %1339 = vmatpush2.msra.mxu0 0.0
          %1340 = vmatprep.subr.mxu0 0.0
          %1341 = vmatpush2.msra.mxu0 0.0
          %1342 = vmatprep.subr.mxu0 0.0
          %1343 = vmatpush2.msra.mxu0 0.0
          %1344 = vmatprep.subr.mxu0 0.0
          %1345 = vmatpush2.msra.mxu0 0.0
          %1346 = vmatprep.subr.mxu0 0.0
          %1347 = vmatpush2.msra.mxu0 0.0
          %1348 = vmatprep.subr.mxu0 0.0
          %1349 = vmatpush2.msra.mxu0 0.0
          %1350 = vmatprep.subr.mxu0 0.0
          %1351 = vmatpush2.msra.mxu0 0.0
          %1352 = vmatprep.subr.mxu0 0.0
          %1353 = vmatpush2.msra.mxu0 0.0
          %1354 = vmatprep.subr.mxu0 0.0
          %1355 = vmatpush2.msra.mxu0 0.0
          %1356 = vmatprep.subr.mxu0 0.0
          %1357 = vmatpush2.msra.mxu0 0.0
          %1358 = vmatprep.mubr.f32.mxu0 0.0
          %1359 = vmatmul.mubr.f32.gmra.mxu0 %v1247
          %v1360 = vpop.f32.mrf.mxu0
          %v1361 = vadd.f32 0.0, %v1360
          %v1362 = vpop.f32.mrf.mxu0
          %1363 = vmatprep.mubr.f32.mxu0 0.0
          %1364 = vmatmul.mubr.f32.gmra.mxu0 %v1250
          %v1365 = vpop.f32.mrf.mxu0
          %v1366 = vadd.f32 0.0, %v1365
          %v1367 = vpop.f32.mrf.mxu0
          %1368 = vmatprep.mubr.f32.mxu0 0.0
          %1369 = vmatmul.mubr.f32.gmra.mxu0 %v1253
          %v1370 = vpop.f32.mrf.mxu0
          %v1371 = vadd.f32 0.0, %v1370
          %v1372 = vpop.f32.mrf.mxu0
          %1373 = vmatprep.mubr.f32.mxu0 0.0
          %1374 = vmatmul.mubr.f32.gmra.mxu0 %v1256
          %v1375 = vpop.f32.mrf.mxu0
          %v1376 = vadd.f32 0.0, %v1375
          %v1377 = vpop.f32.mrf.mxu0
          %1378 = vmatprep.mubr.f32.mxu0 0.0
          %1379 = vmatmul.mubr.f32.gmra.mxu0 %v1259
          %v1380 = vpop.f32.mrf.mxu0
          %v1381 = vadd.f32 0.0, %v1380
          %v1382 = vpop.f32.mrf.mxu0
          %1383 = vmatprep.mubr.f32.mxu0 0.0
          %1384 = vmatmul.mubr.f32.gmra.mxu0 %v1262
          %v1385 = vpop.f32.mrf.mxu0
          %v1386 = vadd.f32 0.0, %v1385
          %v1387 = vpop.f32.mrf.mxu0
          %1388 = vmatprep.mubr.f32.mxu0 0.0
          %1389 = vmatmul.mubr.f32.gmra.mxu0 %v1265
          %v1390 = vpop.f32.mrf.mxu0
          %v1391 = vadd.f32 0.0, %v1390
          %v1392 = vpop.f32.mrf.mxu0
          %1393 = vmatprep.mubr.f32.mxu0 0.0
          %1394 = vmatmul.mubr.f32.gmra.mxu0 %v1268
          %v1395 = vpop.f32.mrf.mxu0
          %v1396 = vadd.f32 0.0, %v1395
          %v1397 = vpop.f32.mrf.mxu0
          %1398 = vmatprep.mubr.f32.mxu0 0.0
          %1399 = vmatmul.mubr.f32.gmra.mxu0 %v1271
          %v1400 = vpop.f32.mrf.mxu0
          %v1401 = vadd.f32 0.0, %v1400
          %v1402 = vpop.f32.mrf.mxu0
          %1403 = vmatprep.mubr.f32.mxu0 0.0
          %1404 = vmatmul.mubr.f32.gmra.mxu0 %v1274
          %v1405 = vpop.f32.mrf.mxu0
          %v1406 = vadd.f32 0.0, %v1405
          %v1407 = vpop.f32.mrf.mxu0
          %1408 = vmatprep.mubr.f32.mxu0 0.0
          %1409 = vmatmul.mubr.f32.gmra.mxu0 %v1277
          %v1410 = vpop.f32.mrf.mxu0
          %v1411 = vadd.f32 0.0, %v1410
          %v1412 = vpop.f32.mrf.mxu0
          %1413 = vmatprep.mubr.f32.mxu0 0.0
          %1414 = vmatmul.mubr.f32.gmra.mxu0 %v1280
          %v1415 = vpop.f32.mrf.mxu0
          %v1416 = vadd.f32 0.0, %v1415
          %v1417 = vpop.f32.mrf.mxu0
          %1418 = vmatprep.mubr.f32.mxu0 0.0
          %1419 = vmatmul.mubr.f32.gmra.mxu0 %v1283
          %v1420 = vpop.f32.mrf.mxu0
          %v1421 = vadd.f32 0.0, %v1420
          %v1422 = vpop.f32.mrf.mxu0
          %1423 = vmatprep.mubr.f32.mxu0 0.0
          %1424 = vmatmul.mubr.f32.gmra.mxu0 %v1286
          %v1425 = vpop.f32.mrf.mxu0
          %v1426 = vadd.f32 0.0, %v1425
          %v1427 = vpop.f32.mrf.mxu0
          %1428 = vmatprep.mubr.f32.mxu0 0.0
          %1429 = vmatmul.mubr.f32.gmra.mxu0 %v1289
          %v1430 = vpop.f32.mrf.mxu0
          %v1431 = vadd.f32 0.0, %v1430
          %v1432 = vpop.f32.mrf.mxu0
          %1433 = vmatprep.mubr.f32.mxu0 0.0
          %1434 = vmatmul.mubr.f32.gmra.mxu0 %v1292
          %v1435 = vpop.f32.mrf.mxu0
          %v1436 = vadd.f32 0.0, %v1435
          %v1437 = vpop.f32.mrf.mxu0
          %1438 = vdwg.mxu0
          %v1439 = vadd.f32 %v1042, %v1361
          %v1440 = vadd.f32 %v1047, %v1366
          %v1441 = vadd.f32 %v1052, %v1371
          %v1442 = vadd.f32 %v1057, %v1376
          %v1443 = vadd.f32 %v1062, %v1381
          %v1444 = vadd.f32 %v1067, %v1386
          %v1445 = vadd.f32 %v1072, %v1391
          %v1446 = vadd.f32 %v1077, %v1396
          %v1447 = vadd.f32 %v1082, %v1401
          %v1448 = vadd.f32 %v1087, %v1406
          %v1449 = vadd.f32 %v1092, %v1411
          %v1450 = vadd.f32 %v1097, %v1416
          %v1451 = vadd.f32 %v1102, %v1421
          %v1452 = vadd.f32 %v1107, %v1426
          %v1453 = vadd.f32 %v1112, %v1431
          %v1454 = vadd.f32 %v1117, %v1436
          %vm1455 = vcmp.gt.f32.partialorder %v1439, 0.0
          %vm1456 = vcmp.gt.f32.partialorder %v1440, 0.0
          %vm1457 = vcmp.gt.f32.partialorder %v1441, 0.0
          %vm1458 = vcmp.gt.f32.partialorder %v1442, 0.0
          %vm1459 = vcmp.gt.f32.partialorder %v1443, 0.0
          %vm1460 = vcmp.gt.f32.partialorder %v1444, 0.0
          %vm1461 = vcmp.gt.f32.partialorder %v1445, 0.0
          %vm1462 = vcmp.gt.f32.partialorder %v1446, 0.0
          %vm1463 = vcmp.gt.f32.partialorder %v1447, 0.0
          %vm1464 = vcmp.gt.f32.partialorder %v1448, 0.0
          %vm1465 = vcmp.gt.f32.partialorder %v1449, 0.0
          %vm1466 = vcmp.gt.f32.partialorder %v1450, 0.0
          %vm1467 = vcmp.gt.f32.partialorder %v1451, 0.0
          %vm1468 = vcmp.gt.f32.partialorder %v1452, 0.0
          %vm1469 = vcmp.gt.f32.partialorder %v1453, 0.0
          %vm1470 = vcmp.gt.f32.partialorder %v1454, 0.0
          %v1471 = vmul.f32 %v1439, 0.2
          %v1472 = vmul.f32 %v1440, 0.2
          %v1473 = vmul.f32 %v1441, 0.2
          %v1474 = vmul.f32 %v1442, 0.2
          %v1475 = vmul.f32 %v1443, 0.2
          %v1476 = vmul.f32 %v1444, 0.2
          %v1477 = vmul.f32 %v1445, 0.2
          %v1478 = vmul.f32 %v1446, 0.2
          %v1479 = vmul.f32 %v1447, 0.2
          %v1480 = vmul.f32 %v1448, 0.2
          %v1481 = vmul.f32 %v1449, 0.2
          %v1482 = vmul.f32 %v1450, 0.2
          %v1483 = vmul.f32 %v1451, 0.2
          %v1484 = vmul.f32 %v1452, 0.2
          %v1485 = vmul.f32 %v1453, 0.2
          %v1486 = vmul.f32 %v1454, 0.2
          %v1487 = vsel %vm1455, %v1439, %v1471
          %v1488 = vsel %vm1456, %v1440, %v1472
          %v1489 = vsel %vm1457, %v1441, %v1473
          %v1490 = vsel %vm1458, %v1442, %v1474
          %v1491 = vsel %vm1459, %v1443, %v1475
          %v1492 = vsel %vm1460, %v1444, %v1476
          %v1493 = vsel %vm1461, %v1445, %v1477
          %v1494 = vsel %vm1462, %v1446, %v1478
          %v1495 = vsel %vm1463, %v1447, %v1479
          %v1496 = vsel %vm1464, %v1448, %v1480
          %v1497 = vsel %vm1465, %v1449, %v1481
          %v1498 = vsel %vm1466, %v1450, %v1482
          %v1499 = vsel %vm1467, %v1451, %v1483
          %v1500 = vsel %vm1468, %v1452, %v1484
          %v1501 = vsel %vm1469, %v1453, %v1485
          %v1502 = vsel %vm1470, %v1454, %v1486
          %v1503 = vld [vmem:[#allocation3] sm:$0x1]
          %v1504 = vmax.f32 %v1487, %v1491
          %v1505 = vmax.f32 %v1488, %v1492
          %v1506 = vmax.f32 %v1489, %v1493
          %v1507 = vmax.f32 %v1490, %v1494
          %v1508 = vmax.f32 %v1504, %v1495
          %v1509 = vmax.f32 %v1505, %v1496
          %v1510 = vmax.f32 %v1506, %v1497
          %v1511 = vmax.f32 %v1507, %v1498
          %v1512 = vmax.f32 %v1508, %v1499
          %v1513 = vmax.f32 %v1509, %v1500
          %v1514 = vmax.f32 %v1510, %v1501
          %v1515 = vmax.f32 %v1511, %v1502
          %v1516 = vmax.f32 %v1512, %v1513
          %v1517 = vmax.f32 %v1514, %v1515
          %v1518 = vmax.f32 %v1516, %v1517
          %v1519 = vrot.slane %v1518, 4
          %v1520 = vmax.f32 %v1518, %v1519
          %v1521 = vrot.slane %v1520, 2
          %v1522 = vmax.f32 %v1520, %v1521
          %v1523 = vrot.slane %v1522, 1
          %v1524 = vmax.f32 %v1522, %v1523
          %v1525 = vmax.f32 %v1503, %v1524
          %v1526 = vsub.f32 %v1503, %v1525
          %v1527 = vmul.f32 %v1526, 1.442695
          %v1528 = vpow.pop %v1527
          %v1530 = vlaneseq
          %v1531 = vshrl.u32 %v1530, 7
          %v1532 = vsub.s32 0, %v1531
          %v1533 = vrot.slane %v1525, %v1532
          %v1535 = vsub.f32 %v1487, %v1533
          %v1536 = vsub.f32 %v1488, %v1533
          %v1537 = vsub.f32 %v1489, %v1533
          %v1538 = vsub.f32 %v1490, %v1533
          %v1539 = vsub.f32 %v1491, %v1533
          %v1540 = vsub.f32 %v1492, %v1533
          %v1541 = vsub.f32 %v1493, %v1533
          %v1542 = vsub.f32 %v1494, %v1533
          %v1543 = vsub.f32 %v1495, %v1533
          %v1544 = vsub.f32 %v1496, %v1533
          %v1545 = vsub.f32 %v1497, %v1533
          %v1546 = vsub.f32 %v1498, %v1533
          %v1547 = vsub.f32 %v1499, %v1533
          %v1548 = vsub.f32 %v1500, %v1533
          %v1549 = vsub.f32 %v1501, %v1533
          %v1550 = vsub.f32 %v1502, %v1533
          %v1551 = vmul.f32 %v1535, 1.442695
          %v1552 = vpow.pop %v1551
          %v1553 = vmul.f32 %v1536, 1.442695
          %v1554 = vpow.pop %v1553
          %v1555 = vmul.f32 %v1537, 1.442695
          %v1556 = vpow.pop %v1555
          %v1557 = vmul.f32 %v1538, 1.442695
          %v1558 = vpow.pop %v1557
          %v1559 = vmul.f32 %v1539, 1.442695
          %v1560 = vpow.pop %v1559
          %v1561 = vmul.f32 %v1540, 1.442695
          %v1562 = vpow.pop %v1561
          %v1563 = vmul.f32 %v1541, 1.442695
          %v1564 = vpow.pop %v1563
          %v1565 = vmul.f32 %v1542, 1.442695
          %v1566 = vpow.pop %v1565
          %v1567 = vmul.f32 %v1543, 1.442695
          %v1568 = vpow.pop %v1567
          %v1569 = vmul.f32 %v1544, 1.442695
          %v1570 = vpow.pop %v1569
          %v1571 = vmul.f32 %v1545, 1.442695
          %v1572 = vpow.pop %v1571
          %v1573 = vmul.f32 %v1546, 1.442695
          %v1574 = vpow.pop %v1573
          %v1575 = vmul.f32 %v1547, 1.442695
          %v1576 = vpow.pop %v1575
          %v1577 = vmul.f32 %v1548, 1.442695
          %v1578 = vpow.pop %v1577
          %v1579 = vmul.f32 %v1549, 1.442695
          %v1580 = vpow.pop %v1579
          %v1581 = vmul.f32 %v1550, 1.442695
          %v1582 = vpow.pop %v1581
          %v1583 = vld [vmem:[#allocation4] sm:$0xff]
          %v1584 = vld [vmem:[#allocation4 + $0x8] sm:$0xff]
          %v1585 = vld [vmem:[#allocation4 + $0x10] sm:$0xff]
          %v1586 = vld [vmem:[#allocation4 + $0x18] sm:$0xff]
          %v1587 = vld [vmem:[#allocation4 + $0x20] sm:$0xff]
          %v1588 = vld [vmem:[#allocation4 + $0x28] sm:$0xff]
          %v1589 = vld [vmem:[#allocation4 + $0x30] sm:$0xff]
          %v1590 = vld [vmem:[#allocation4 + $0x38] sm:$0xff]
          %v1592 = vlaneseq
          %v1593 = vshrl.u32 %v1592, 7
          %v1594 = vsub.s32 0, %v1593
          %v1595 = vrot.slane %v1528, %v1594
          %v1597 = vmul.f32 %v1583, %v1595
          %v1598 = vmul.f32 %v1584, %v1595
          %v1599 = vmul.f32 %v1585, %v1595
          %v1600 = vmul.f32 %v1586, %v1595
          %v1601 = vmul.f32 %v1587, %v1595
          %v1602 = vmul.f32 %v1588, %v1595
          %v1603 = vmul.f32 %v1589, %v1595
          %v1604 = vmul.f32 %v1590, %v1595
          %1605 = vxpose.xlu0.b32.start [1/16] %v1221, 128
          %1606 = vxpose.xlu0.b32.cont [2/16] %v1222, 128
          %1607 = vxpose.xlu0.b32.cont [3/16] %v1223, 128
          %1608 = vxpose.xlu0.b32.cont [4/16] %v1224, 128
          %1609 = vxpose.xlu0.b32.cont [5/16] %v1225, 128
          %1610 = vxpose.xlu0.b32.cont [6/16] %v1226, 128
          %1611 = vxpose.xlu0.b32.cont [7/16] %v1227, 128
          %1612 = vxpose.xlu0.b32.cont [8/16] %v1228, 128
          %1613 = vxpose.xlu0.b32.cont [9/16] %v1229, 128
          %1614 = vxpose.xlu0.b32.cont [10/16] %v1230, 128
          %1615 = vxpose.xlu0.b32.cont [11/16] %v1231, 128
          %1616 = vxpose.xlu0.b32.cont [12/16] %v1232, 128
          %1617 = vxpose.xlu0.b32.cont [13/16] %v1233, 128
          %1618 = vxpose.xlu0.b32.cont [14/16] %v1234, 128
          %1619 = vxpose.xlu0.b32.cont [15/16] %v1235, 128
          %1620 = vxpose.xlu0.b32.end [16/16] %v1236, 128
          %v1621 = vpop.trf.xlu0
          %v1622 = vpop.trf.xlu0
          %v1623 = vpop.trf.xlu0
          %v1624 = vpop.trf.xlu0
          %v1625 = vpop.trf.xlu0
          %v1626 = vpop.trf.xlu0
          %v1627 = vpop.trf.xlu0
          %v1628 = vpop.trf.xlu0
          %v1629 = vpop.trf.xlu0
          %v1630 = vpop.trf.xlu0
          %v1631 = vpop.trf.xlu0
          %v1632 = vpop.trf.xlu0
          %v1633 = vpop.trf.xlu0
          %v1634 = vpop.trf.xlu0
          %v1635 = vpop.trf.xlu0
          %v1636 = vpop.trf.xlu0
          %1637 = vmatprep.subr.mxu0 0.0
          %1638 = vmatpush1.msra.mxu0 %v1582
          %1639 = vmatprep.subr.mxu0 0.0
          %1640 = vmatpush1.msra.mxu0 %v1580
          %1641 = vmatprep.subr.mxu0 0.0
          %1642 = vmatpush1.msra.mxu0 %v1578
          %1643 = vmatprep.subr.mxu0 0.0
          %1644 = vmatpush1.msra.mxu0 %v1576
          %1645 = vmatprep.subr.mxu0 0.0
          %1646 = vmatpush1.msra.mxu0 %v1574
          %1647 = vmatprep.subr.mxu0 0.0
          %1648 = vmatpush1.msra.mxu0 %v1572
          %1649 = vmatprep.subr.mxu0 0.0
          %1650 = vmatpush1.msra.mxu0 %v1570
          %1651 = vmatprep.subr.mxu0 0.0
          %1652 = vmatpush1.msra.mxu0 %v1568
          %1653 = vmatprep.subr.mxu0 0.0
          %1654 = vmatpush1.msra.mxu0 %v1566
          %1655 = vmatprep.subr.mxu0 0.0
          %1656 = vmatpush1.msra.mxu0 %v1564
          %1657 = vmatprep.subr.mxu0 0.0
          %1658 = vmatpush1.msra.mxu0 %v1562
          %1659 = vmatprep.subr.mxu0 0.0
          %1660 = vmatpush1.msra.mxu0 %v1560
          %1661 = vmatprep.subr.mxu0 0.0
          %1662 = vmatpush1.msra.mxu0 %v1558
          %1663 = vmatprep.subr.mxu0 0.0
          %1664 = vmatpush1.msra.mxu0 %v1556
          %1665 = vmatprep.subr.mxu0 0.0
          %1666 = vmatpush1.msra.mxu0 %v1554
          %1667 = vmatprep.subr.mxu0 0.0
          %1668 = vmatpush1.msra.mxu0 %v1552
          %1669 = vmatprep.subr.mxu0 0.0
          %1670 = vmatpush2.msra.mxu0 0.0
          %1671 = vmatprep.subr.mxu0 0.0
          %1672 = vmatpush2.msra.mxu0 0.0
          %1673 = vmatprep.subr.mxu0 0.0
          %1674 = vmatpush2.msra.mxu0 0.0
          %1675 = vmatprep.subr.mxu0 0.0
          %1676 = vmatpush2.msra.mxu0 0.0
          %1677 = vmatprep.subr.mxu0 0.0
          %1678 = vmatpush2.msra.mxu0 0.0
          %1679 = vmatprep.subr.mxu0 0.0
          %1680 = vmatpush2.msra.mxu0 0.0
          %1681 = vmatprep.subr.mxu0 0.0
          %1682 = vmatpush2.msra.mxu0 0.0
          %1683 = vmatprep.subr.mxu0 0.0
          %1684 = vmatpush2.msra.mxu0 0.0
          %1685 = vmatprep.subr.mxu0 0.0
          %1686 = vmatpush2.msra.mxu0 0.0
          %1687 = vmatprep.subr.mxu0 0.0
          %1688 = vmatpush2.msra.mxu0 0.0
          %1689 = vmatprep.subr.mxu0 0.0
          %1690 = vmatpush2.msra.mxu0 0.0
          %1691 = vmatprep.subr.mxu0 0.0
          %1692 = vmatpush2.msra.mxu0 0.0
          %1693 = vmatprep.subr.mxu0 0.0
          %1694 = vmatpush2.msra.mxu0 0.0
          %1695 = vmatprep.subr.mxu0 0.0
          %1696 = vmatpush2.msra.mxu0 0.0
          %1697 = vmatprep.subr.mxu0 0.0
          %1698 = vmatpush2.msra.mxu0 0.0
          %1699 = vmatprep.subr.mxu0 0.0
          %1700 = vmatpush2.msra.mxu0 0.0
          %1701 = vmatprep.mubr.f32.mxu0 0.0
          %1702 = vmatmul.mubr.f32.gmra.mxu0 %v1621
          %v1703 = vpop.f32.mrf.mxu0
          %v1704 = vadd.f32 0.0, %v1703
          %v1705 = vpop.f32.mrf.mxu0
          %1706 = vmatprep.mubr.f32.mxu0 0.0
          %1707 = vmatmul.mubr.f32.gmra.mxu0 %v1622
          %v1708 = vpop.f32.mrf.mxu0
          %v1709 = vadd.f32 0.0, %v1708
          %v1710 = vpop.f32.mrf.mxu0
          %1711 = vmatprep.mubr.f32.mxu0 0.0
          %1712 = vmatmul.mubr.f32.gmra.mxu0 %v1623
          %v1713 = vpop.f32.mrf.mxu0
          %v1714 = vadd.f32 0.0, %v1713
          %v1715 = vpop.f32.mrf.mxu0
          %1716 = vmatprep.mubr.f32.mxu0 0.0
          %1717 = vmatmul.mubr.f32.gmra.mxu0 %v1624
          %v1718 = vpop.f32.mrf.mxu0
          %v1719 = vadd.f32 0.0, %v1718
          %v1720 = vpop.f32.mrf.mxu0
          %1721 = vmatprep.mubr.f32.mxu0 0.0
          %1722 = vmatmul.mubr.f32.gmra.mxu0 %v1625
          %v1723 = vpop.f32.mrf.mxu0
          %v1724 = vadd.f32 0.0, %v1723
          %v1725 = vpop.f32.mrf.mxu0
          %1726 = vmatprep.mubr.f32.mxu0 0.0
          %1727 = vmatmul.mubr.f32.gmra.mxu0 %v1626
          %v1728 = vpop.f32.mrf.mxu0
          %v1729 = vadd.f32 0.0, %v1728
          %v1730 = vpop.f32.mrf.mxu0
          %1731 = vmatprep.mubr.f32.mxu0 0.0
          %1732 = vmatmul.mubr.f32.gmra.mxu0 %v1627
          %v1733 = vpop.f32.mrf.mxu0
          %v1734 = vadd.f32 0.0, %v1733
          %v1735 = vpop.f32.mrf.mxu0
          %1736 = vmatprep.mubr.f32.mxu0 0.0
          %1737 = vmatmul.mubr.f32.gmra.mxu0 %v1628
          %v1738 = vpop.f32.mrf.mxu0
          %v1739 = vadd.f32 0.0, %v1738
          %v1740 = vpop.f32.mrf.mxu0
          %1741 = vdwg.mxu0
          %v1742 = vadd.f32 %v1597, %v1704
          %v1743 = vadd.f32 %v1598, %v1709
          %v1744 = vadd.f32 %v1599, %v1714
          %v1745 = vadd.f32 %v1600, %v1719
          %v1746 = vadd.f32 %v1601, %v1724
          %v1747 = vadd.f32 %v1602, %v1729
          %v1748 = vadd.f32 %v1603, %v1734
          %v1749 = vadd.f32 %v1604, %v1739
          %1750 = vst [vmem:[#allocation4] sm:$0xff] %v1742
          %1751 = vst [vmem:[#allocation4 + $0x8] sm:$0xff] %v1743
          %1752 = vst [vmem:[#allocation4 + $0x10] sm:$0xff] %v1744
          %1753 = vst [vmem:[#allocation4 + $0x18] sm:$0xff] %v1745
          %1754 = vst [vmem:[#allocation4 + $0x20] sm:$0xff] %v1746
          %1755 = vst [vmem:[#allocation4 + $0x28] sm:$0xff] %v1747
          %1756 = vst [vmem:[#allocation4 + $0x30] sm:$0xff] %v1748
          %1757 = vst [vmem:[#allocation4 + $0x38] sm:$0xff] %v1749
          %v1758 = vld [vmem:[#allocation5] sm:$0xff]
          %v1759 = vld [vmem:[#allocation5 + $0x8] sm:$0xff]
          %v1760 = vld [vmem:[#allocation5 + $0x10] sm:$0xff]
          %v1761 = vld [vmem:[#allocation5 + $0x18] sm:$0xff]
          %v1762 = vld [vmem:[#allocation5 + $0x20] sm:$0xff]
          %v1763 = vld [vmem:[#allocation5 + $0x28] sm:$0xff]
          %v1764 = vld [vmem:[#allocation5 + $0x30] sm:$0xff]
          %v1765 = vld [vmem:[#allocation5 + $0x38] sm:$0xff]
          %v1766 = vmul.f32 %v1758, %v1595
          %v1767 = vmul.f32 %v1759, %v1595
          %v1768 = vmul.f32 %v1760, %v1595
          %v1769 = vmul.f32 %v1761, %v1595
          %v1770 = vmul.f32 %v1762, %v1595
          %v1771 = vmul.f32 %v1763, %v1595
          %v1772 = vmul.f32 %v1764, %v1595
          %v1773 = vmul.f32 %v1765, %v1595
          %v1774 = vmul.f32 %v1552, %v1042
          %v1775 = vmul.f32 %v1554, %v1047
          %v1776 = vmul.f32 %v1556, %v1052
          %v1777 = vmul.f32 %v1558, %v1057
          %v1778 = vmul.f32 %v1560, %v1062
          %v1779 = vmul.f32 %v1562, %v1067
          %v1780 = vmul.f32 %v1564, %v1072
          %v1781 = vmul.f32 %v1566, %v1077
          %v1782 = vmul.f32 %v1568, %v1082
          %v1783 = vmul.f32 %v1570, %v1087
          %v1784 = vmul.f32 %v1572, %v1092
          %v1785 = vmul.f32 %v1574, %v1097
          %v1786 = vmul.f32 %v1576, %v1102
          %v1787 = vmul.f32 %v1578, %v1107
          %v1788 = vmul.f32 %v1580, %v1112
          %v1789 = vmul.f32 %v1582, %v1117
          %1790 = vmatprep.subr.mxu0 0.0
          %1791 = vmatpush1.msra.mxu0 %v1789
          %1792 = vmatprep.subr.mxu0 0.0
          %1793 = vmatpush1.msra.mxu0 %v1788
          %1794 = vmatprep.subr.mxu0 0.0
          %1795 = vmatpush1.msra.mxu0 %v1787
          %1796 = vmatprep.subr.mxu0 0.0
          %1797 = vmatpush1.msra.mxu0 %v1786
          %1798 = vmatprep.subr.mxu0 0.0
          %1799 = vmatpush1.msra.mxu0 %v1785
          %1800 = vmatprep.subr.mxu0 0.0
          %1801 = vmatpush1.msra.mxu0 %v1784
          %1802 = vmatprep.subr.mxu0 0.0
          %1803 = vmatpush1.msra.mxu0 %v1783
          %1804 = vmatprep.subr.mxu0 0.0
          %1805 = vmatpush1.msra.mxu0 %v1782
          %1806 = vmatprep.subr.mxu0 0.0
          %1807 = vmatpush1.msra.mxu0 %v1781
          %1808 = vmatprep.subr.mxu0 0.0
          %1809 = vmatpush1.msra.mxu0 %v1780
          %1810 = vmatprep.subr.mxu0 0.0
          %1811 = vmatpush1.msra.mxu0 %v1779
          %1812 = vmatprep.subr.mxu0 0.0
          %1813 = vmatpush1.msra.mxu0 %v1778
          %1814 = vmatprep.subr.mxu0 0.0
          %1815 = vmatpush1.msra.mxu0 %v1777
          %1816 = vmatprep.subr.mxu0 0.0
          %1817 = vmatpush1.msra.mxu0 %v1776
          %1818 = vmatprep.subr.mxu0 0.0
          %1819 = vmatpush1.msra.mxu0 %v1775
          %1820 = vmatprep.subr.mxu0 0.0
          %1821 = vmatpush1.msra.mxu0 %v1774
          %1822 = vmatprep.subr.mxu0 0.0
          %1823 = vmatpush2.msra.mxu0 0.0
          %1824 = vmatprep.subr.mxu0 0.0
          %1825 = vmatpush2.msra.mxu0 0.0
          %1826 = vmatprep.subr.mxu0 0.0
          %1827 = vmatpush2.msra.mxu0 0.0
          %1828 = vmatprep.subr.mxu0 0.0
          %1829 = vmatpush2.msra.mxu0 0.0
          %1830 = vmatprep.subr.mxu0 0.0
          %1831 = vmatpush2.msra.mxu0 0.0
          %1832 = vmatprep.subr.mxu0 0.0
          %1833 = vmatpush2.msra.mxu0 0.0
          %1834 = vmatprep.subr.mxu0 0.0
          %1835 = vmatpush2.msra.mxu0 0.0
          %1836 = vmatprep.subr.mxu0 0.0
          %1837 = vmatpush2.msra.mxu0 0.0
          %1838 = vmatprep.subr.mxu0 0.0
          %1839 = vmatpush2.msra.mxu0 0.0
          %1840 = vmatprep.subr.mxu0 0.0
          %1841 = vmatpush2.msra.mxu0 0.0
          %1842 = vmatprep.subr.mxu0 0.0
          %1843 = vmatpush2.msra.mxu0 0.0
          %1844 = vmatprep.subr.mxu0 0.0
          %1845 = vmatpush2.msra.mxu0 0.0
          %1846 = vmatprep.subr.mxu0 0.0
          %1847 = vmatpush2.msra.mxu0 0.0
          %1848 = vmatprep.subr.mxu0 0.0
          %1849 = vmatpush2.msra.mxu0 0.0
          %1850 = vmatprep.subr.mxu0 0.0
          %1851 = vmatpush2.msra.mxu0 0.0
          %1852 = vmatprep.subr.mxu0 0.0
          %1853 = vmatpush2.msra.mxu0 0.0
          %1854 = vmatprep.mubr.f32.mxu0 0.0
          %1855 = vmatmul.mubr.f32.gmra.mxu0 %v1621
          %v1856 = vpop.f32.mrf.mxu0
          %v1857 = vadd.f32 0.0, %v1856
          %v1858 = vpop.f32.mrf.mxu0
          %1859 = vmatprep.mubr.f32.mxu0 0.0
          %1860 = vmatmul.mubr.f32.gmra.mxu0 %v1622
          %v1861 = vpop.f32.mrf.mxu0
          %v1862 = vadd.f32 0.0, %v1861
          %v1863 = vpop.f32.mrf.mxu0
          %1864 = vmatprep.mubr.f32.mxu0 0.0
          %1865 = vmatmul.mubr.f32.gmra.mxu0 %v1623
          %v1866 = vpop.f32.mrf.mxu0
          %v1867 = vadd.f32 0.0, %v1866
          %v1868 = vpop.f32.mrf.mxu0
          %1869 = vmatprep.mubr.f32.mxu0 0.0
          %1870 = vmatmul.mubr.f32.gmra.mxu0 %v1624
          %v1871 = vpop.f32.mrf.mxu0
          %v1872 = vadd.f32 0.0, %v1871
          %v1873 = vpop.f32.mrf.mxu0
          %1874 = vmatprep.mubr.f32.mxu0 0.0
          %1875 = vmatmul.mubr.f32.gmra.mxu0 %v1625
          %v1876 = vpop.f32.mrf.mxu0
          %v1877 = vadd.f32 0.0, %v1876
          %v1878 = vpop.f32.mrf.mxu0
          %1879 = vmatprep.mubr.f32.mxu0 0.0
          %1880 = vmatmul.mubr.f32.gmra.mxu0 %v1626
          %v1881 = vpop.f32.mrf.mxu0
          %v1882 = vadd.f32 0.0, %v1881
          %v1883 = vpop.f32.mrf.mxu0
          %1884 = vmatprep.mubr.f32.mxu0 0.0
          %1885 = vmatmul.mubr.f32.gmra.mxu0 %v1627
          %v1886 = vpop.f32.mrf.mxu0
          %v1887 = vadd.f32 0.0, %v1886
          %v1888 = vpop.f32.mrf.mxu0
          %1889 = vmatprep.mubr.f32.mxu0 0.0
          %1890 = vmatmul.mubr.f32.gmra.mxu0 %v1628
          %v1891 = vpop.f32.mrf.mxu0
          %v1892 = vadd.f32 0.0, %v1891
          %v1893 = vpop.f32.mrf.mxu0
          %1894 = vdwg.mxu0
          %v1895 = vadd.f32 %v1766, %v1857
          %v1896 = vadd.f32 %v1767, %v1862
          %v1897 = vadd.f32 %v1768, %v1867
          %v1898 = vadd.f32 %v1769, %v1872
          %v1899 = vadd.f32 %v1770, %v1877
          %v1900 = vadd.f32 %v1771, %v1882
          %v1901 = vadd.f32 %v1772, %v1887
          %v1902 = vadd.f32 %v1773, %v1892
          %1903 = vst [vmem:[#allocation5] sm:$0xff] %v1895
          %1904 = vst [vmem:[#allocation5 + $0x8] sm:$0xff] %v1896
          %1905 = vst [vmem:[#allocation5 + $0x10] sm:$0xff] %v1897
          %1906 = vst [vmem:[#allocation5 + $0x18] sm:$0xff] %v1898
          %1907 = vst [vmem:[#allocation5 + $0x20] sm:$0xff] %v1899
          %1908 = vst [vmem:[#allocation5 + $0x28] sm:$0xff] %v1900
          %1909 = vst [vmem:[#allocation5 + $0x30] sm:$0xff] %v1901
          %1910 = vst [vmem:[#allocation5 + $0x38] sm:$0xff] %v1902
          %1911 = vst [vmem:[#allocation3] sm:$0x1] %v1525
        $region60: #{tpu_custom_call.1} parent=51 // pred_fallthru
          _
        %p1912 = scmp.eq.s32.totalorder %s39, 3
        // Predicated region
        $region61: #{tpu_custom_call.1} parent=51 // pred_check
          %p1913 = pneg %p1912
        $region62: #{tpu_custom_call.1} parent=51 // pred_check_branch
          %1915 = sbr.rel (%p1913) target = $region64
        $region63: #{tpu_custom_call.1} parent=51 // pred_region
          %v1916 = vld [vmem:[#allocation4] sm:$0xff]
          %v1917 = vld [vmem:[#allocation4 + $0x8] sm:$0xff]
          %v1918 = vld [vmem:[#allocation4 + $0x10] sm:$0xff]
          %v1919 = vld [vmem:[#allocation4 + $0x18] sm:$0xff]
          %v1920 = vld [vmem:[#allocation4 + $0x20] sm:$0xff]
          %v1921 = vld [vmem:[#allocation4 + $0x28] sm:$0xff]
          %v1922 = vld [vmem:[#allocation4 + $0x30] sm:$0xff]
          %v1923 = vld [vmem:[#allocation4 + $0x38] sm:$0xff]
          %vm1924 = vcmp.eq.f32.partialorder %v1916, 0.0
          %vm1925 = vcmp.eq.f32.partialorder %v1917, 0.0
          %vm1926 = vcmp.eq.f32.partialorder %v1918, 0.0
          %vm1927 = vcmp.eq.f32.partialorder %v1919, 0.0
          %vm1928 = vcmp.eq.f32.partialorder %v1920, 0.0
          %vm1929 = vcmp.eq.f32.partialorder %v1921, 0.0
          %vm1930 = vcmp.eq.f32.partialorder %v1922, 0.0
          %vm1931 = vcmp.eq.f32.partialorder %v1923, 0.0
          %v1932 = vsel %vm1924, 1.0, %v1916
          %v1933 = vsel %vm1925, 1.0, %v1917
          %v1934 = vsel %vm1926, 1.0, %v1918
          %v1935 = vsel %vm1927, 1.0, %v1919
          %v1936 = vsel %vm1928, 1.0, %v1920
          %v1937 = vsel %vm1929, 1.0, %v1921
          %v1938 = vsel %vm1930, 1.0, %v1922
          %v1939 = vsel %vm1931, 1.0, %v1923
          %v1940 = vld [vmem:[#allocation5] sm:$0xff]
          %v1941 = vld [vmem:[#allocation5 + $0x8] sm:$0xff]
          %v1942 = vld [vmem:[#allocation5 + $0x10] sm:$0xff]
          %v1943 = vld [vmem:[#allocation5 + $0x18] sm:$0xff]
          %v1944 = vld [vmem:[#allocation5 + $0x20] sm:$0xff]
          %v1945 = vld [vmem:[#allocation5 + $0x28] sm:$0xff]
          %v1946 = vld [vmem:[#allocation5 + $0x30] sm:$0xff]
          %v1947 = vld [vmem:[#allocation5 + $0x38] sm:$0xff]
          %v1948 = vrcp.pop %v1932
          %v1949 = vrcp.pop %v1933
          %v1950 = vrcp.pop %v1934
          %v1951 = vrcp.pop %v1935
          %v1952 = vrcp.pop %v1936
          %v1953 = vrcp.pop %v1937
          %v1954 = vrcp.pop %v1938
          %v1955 = vrcp.pop %v1939
          %v1956 = vmul.f32 %v1940, %v1948
          %v1957 = vmul.f32 %v1941, %v1949
          %v1958 = vmul.f32 %v1942, %v1950
          %v1959 = vmul.f32 %v1943, %v1951
          %v1960 = vmul.f32 %v1944, %v1952
          %v1961 = vmul.f32 %v1945, %v1953
          %v1962 = vmul.f32 %v1946, %v1954
          %v1963 = vmul.f32 %v1947, %v1955
          %v1964 = vld [vmem:[%s9] sm:$0x1]
          %v1966 = vlaneseq
          %v1967 = vshrl.u32 %v1966, 7
          %v1968 = vsub.s32 0, %v1967
          %v1969 = vrot.slane %v1964, %v1968
          %v1971 = vadd.f32 %v1956, %v1969
          %v1972 = vadd.f32 %v1957, %v1969
          %v1973 = vadd.f32 %v1958, %v1969
          %v1974 = vadd.f32 %v1959, %v1969
          %v1975 = vadd.f32 %v1960, %v1969
          %v1976 = vadd.f32 %v1961, %v1969
          %v1977 = vadd.f32 %v1962, %v1969
          %v1978 = vadd.f32 %v1963, %v1969
          %1979 = vst [vmem:[%s461] sm:$0xff] %v1971
          %1980 = vst [vmem:[%s461 + $0x8] sm:$0xff] %v1972
          %1981 = vst [vmem:[%s461 + $0x10] sm:$0xff] %v1973
          %1982 = vst [vmem:[%s461 + $0x18] sm:$0xff] %v1974
          %1983 = vst [vmem:[%s461 + $0x20] sm:$0xff] %v1975
          %1984 = vst [vmem:[%s461 + $0x28] sm:$0xff] %v1976
          %1985 = vst [vmem:[%s461 + $0x30] sm:$0xff] %v1977
          %1986 = vst [vmem:[%s461 + $0x38] sm:$0xff] %v1978
        $region64: #{tpu_custom_call.1} parent=51 // pred_fallthru
          _
        %s1987 = sand.u32 %s278, 1
        %s1988 = scalar_lea.sflag [#allocation10], %s1987
        %s1989 = sand.u32 %s278, 1
        %s1990 = smul.addr %s1989, 64
        %s1991 = scalar_lea.vmem [#allocation9], %s1990
        // Predicated region
        $region65: #{tpu_custom_call.1} parent=51 // pred_check
          %p1992 = pneg %p288
        $region66: #{tpu_custom_call.1} parent=51 // pred_check_branch
          %1994 = sbr.rel (%p1992) target = $region68
        $region67: #{tpu_custom_call.1} parent=51 // pred_region
          %s1995 = smul.u32 8, %s38
          %s1997 = ssub.s32 1024, 1024
          %1998 = vsyncadd %s1988, %s1997
          %s1999 = smul.addr %s1995, 128
          %s2000 = scalar_lea.hbm %s10, %s1999
          %s2001 = sshll.u32 %s1991, 4
          %s2002 = int_to_ptr.vmem [resolvable:$true] %s2001
          %2007 = dma.vmem_to_hbm [thread:$0]  %s2002, 1024, %s2000, %s1988, 128, 128, 8
        $region68: #{tpu_custom_call.1} parent=51 // pred_fallthru
          _
      $region52: #{tpu_custom_call.1} parent=5 // pred_fallthru
        _
      %p2008 = scmp.le.s32.totalorder 2, %s29
      // Predicated region
      $region69: #{tpu_custom_call.1} parent=5 // pred_check
        %p2009 = pneg %p2008
      $region70: #{tpu_custom_call.1} parent=5 // pred_check_branch
        %2011 = sbr.rel (%p2009) target = $region72
      $region71: #{tpu_custom_call.1} parent=5 // pred_region
        %s2012 = ssub.s32 %s29, 2
        // Predicated region
        $region73: #{tpu_custom_call.1} parent=71 // pred_check
          %p2013 = pneg %p294
        $region74: #{tpu_custom_call.1} parent=71 // pred_check_branch
          %2015 = sbr.rel (%p2013) target = $region76
        $region75: #{tpu_custom_call.1} parent=71 // pred_region
          %s2016 = sand.u32 %s279, 1
          %s2017 = scalar_lea.sflag [#allocation10], %s2016
          %s2018 = sand.u32 %s279, 1
          %s2019 = smul.addr %s2018, 64
          %s2020 = scalar_lea.vmem [#allocation9], %s2019
          %2021 = dma.done %s2017, 1024
        $region76: #{tpu_custom_call.1} parent=71 // pred_fallthru
          _
      $region72: #{tpu_custom_call.1} parent=5 // pred_fallthru
        _
    $region6: #{tpu_custom_call.1} parent=1 // loop_footer
      %s33 = sadd.s32 1, %s29
    $region7: #{tpu_custom_call.1} parent=1 // loop_footer_branch
      %28 = sbr.rel target = $region3
    $region8: #{tpu_custom_call.1} parent=1 // loop_exit
      _
    %2022 = vsyncpa [#allocation10], 1
    %s2023 = scalar_lea.sflag [#allocation10], 1
    %2024 = vsyncpa %s2023, 1

</llo_original>
